<compile_context>
chip_gen: v6e
topology: v6e:2x2x1
jax: 0.10.0
libtpu: 0.0.40
codegen_flags: <defaults>
</compile_context>

<pallas_src>
import jax
import jax.numpy as jnp
from jax import lax
from jax.experimental import pallas as pl
from jax.experimental.pallas import tpu as pltpu


_LANE = 128
_TILE_B_MAX = 2048                     # row cap (reached for narrow dtypes / small F)
_TILE_F_MAX = 2048                     # auto reduction chunk when F must be split
_VMEM_X_TILE_BYTES = 8 * 1024 * 1024   # one x tile; the pipeline double-buffers it
_VMEM_LIMIT_BYTES = 32 * 1024 * 1024   # fits v5e/v6e (128 MiB) and v7x (64 MiB) VMEM
_MIN_ROWS_FULL_F = 256                 # keep F unsplit if >= this many rows still fit
_TINY_BATCH = 128                      # below this, plain XLA beats kernel overhead


def _round_up(v, m):
    return ((v + m - 1) // m) * m


def _choose_tiles(B, F, itemsize, tile_f_max=None):
    """Pick (tile_b, tile_f, nb, nf) obeying the (8,128) rule, VMEM and megacore."""
    b_lane = _round_up(max(B, 1), _LANE)

    if tile_f_max is not None and F > tile_f_max:
        tile_f = tile_f_max                       # caller-forced split (multiple of 128)
    else:
        rows_if_full = _VMEM_X_TILE_BYTES // max(F * itemsize, 1)
        if F <= _TILE_F_MAX or rows_if_full >= _MIN_ROWS_FULL_F:
            tile_f = F                            # keep the reduction axis unsplit
        else:
            tile_f = _TILE_F_MAX                  # multiple of 128
    nf = pl.cdiv(F, tile_f) if tile_f < F else 1

    rows_budget = max(_LANE, _VMEM_X_TILE_BYTES // max(tile_f * itemsize, 1))
    tile_b = min(_TILE_B_MAX, rows_budget, b_lane)
    tile_b = max(_LANE, (tile_b // _LANE) * _LANE)

    # Megacore (v7x): make sure the "parallel" batch axis has >= 2 tiles.
    if tile_b >= b_lane and b_lane >= 2 * _LANE:
        tile_b = max(_LANE, (b_lane // 2 // _LANE) * _LANE)

    nb = pl.cdiv(B, tile_b)
    return tile_b, tile_f, nb, nf


def _single_step_kernel(x_ref, w_ref, b_ref, o_ref):
    # Whole feature dim in one tile: one cross-lane reduce + bias, single write.
    x = x_ref[...].astype(jnp.float32)            # widen in-register; HBM stays narrow
    o_ref[0, :] = jnp.sum(x * w_ref[...], axis=-1) + b_ref[0]


def _make_multi_step_kernel(nf, tile_b, tile_f, f_rem):
    """Split reduction: pure-VPU per-step accumulate, reduce/bias only on last step."""
    n_chunks = tile_f // _LANE

    def kernel(x_ref, w_ref, b_ref, o_ref, acc_ref):
        k = pl.program_id(1)

        @pl.when(k == 0)
        def _init():
            acc_ref[...] = jnp.zeros_like(acc_ref)

        def accumulate(valid_cols):
            # 128-lane multiply-adds into the (tile_b, 128) f32 scratch (VPU only).
            partial = jnp.zeros((tile_b, _LANE), jnp.float32)
            for c in range(n_chunks):
                lo = c * _LANE
                if valid_cols is not None and lo >= valid_cols:
                    break                                     # fully OOB chunk: skip
                xc = x_ref[:, lo:lo + _LANE].astype(jnp.float32)
                if valid_cols is not None and lo + _LANE > valid_cols:
                    lane = lax.broadcasted_iota(jnp.int32, (tile_b, _LANE), 1)
                    xc = jnp.where(lane < (valid_cols - lo), xc, 0.0)
                partial = partial + xc * w_ref[:, lo:lo + _LANE]
            acc_ref[...] += partial

        def finalize():
            # One cross-lane reduce + relayout into the lane-dense output row.
            o_ref[0, :] = jnp.sum(acc_ref[...], axis=-1) + b_ref[0]

        last = nf - 1
        if f_rem:
            @pl.when(k < last)
            def _full_chunks():
                accumulate(None)

            @pl.when(k == last)
            def _ragged_tail():
                accumulate(f_rem)
                finalize()
        else:
            accumulate(None)

            @pl.when(k == last)
            def _last():
                finalize()

    return kernel


def linear_regression(x, weights, bias_term=None, *, tile_f_max=None):
    """Pallas equivalent of LinearRegression.forward: x @ weights (+ bias)."""
    x = jnp.asarray(x)
    weights = jnp.asarray(weights)
    if tile_f_max is not None:
        assert tile_f_max % _LANE == 0, "tile_f_max must be a multiple of 128"

    F = x.shape[-1]
    assert weights.shape == (F,), f"weights must be ({F},), got {weights.shape}"
    lead_shape = x.shape[:-1]
    x2 = x.reshape(-1, F)
    B = x2.shape[0]

    if bias_term is not None:
        bias_term = jnp.asarray(bias_term)
        assert bias_term.size == 1, (
            "x @ weights has shape (batch,); bias_term must have out_features == 1 "
            "to broadcast like the PyTorch module.")
        bias = bias_term.reshape(1).astype(jnp.float32)
    else:
        bias = jnp.zeros((1,), jnp.float32)

    # Tiny problems: pallas_call launch / per-step overhead exceeds total cost.
    if B < _TINY_BATCH:
        y = x2.astype(jnp.float32) @ weights.astype(jnp.float32) + bias[0]
        return y.reshape(lead_shape)

    itemsize = x2.dtype.itemsize
    tile_b, tile_f, nb, nf = _choose_tiles(B, F, itemsize, tile_f_max)
    w2d = weights.reshape(1, F).astype(jnp.float32)

    f_rem = 0
    if nf > 1:
        f_rem = F % tile_f                      # valid cols in the last chunk (0 == full)
        f_pad = nf * tile_f
        if f_pad != F:
            # Only the tiny weight row is padded; x is never copied or padded.
            w2d = jnp.pad(w2d, ((0, 0), (0, f_pad - F)))

    b_pad = nb * tile_b                         # output rows >= B are sliced off below

    kernel = (_single_step_kernel if nf == 1
              else _make_multi_step_kernel(nf, tile_b, tile_f, f_rem))
    scratch = [] if nf == 1 else [pltpu.VMEM((tile_b, _LANE), jnp.float32)]

    out = pl.pallas_call(
        kernel,
        out_shape=jax.ShapeDtypeStruct((1, b_pad), jnp.float32),
        grid_spec=pltpu.PrefetchScalarGridSpec(
            num_scalar_prefetch=0,
            grid=(nb, nf),
            in_specs=[
                pl.BlockSpec((tile_b, tile_f), lambda i, k: (i, k)),
                pl.BlockSpec((1, tile_f), lambda i, k: (0, k)),
                pl.BlockSpec(memory_space=pltpu.MemorySpace.SMEM),
            ],
            out_specs=pl.BlockSpec((1, tile_b), lambda i, k: (0, i)),
            scratch_shapes=scratch,
        ),
        compiler_params=pltpu.CompilerParams(
            dimension_semantics=("parallel", "arbitrary"),
            vmem_limit_bytes=_VMEM_LIMIT_BYTES,
        ),
        cost_estimate=pl.CostEstimate(
            flops=2 * B * F,
            transcendentals=0,
            bytes_accessed=B * F * itemsize + F * 4 + 4 + B * 4,
        ),
    )(x2, w2d, bias)

    return out[0, :B].reshape(lead_shape)


if __name__ == "__main__":
    key = jax.random.PRNGKey(0)
    k_x, k_w, k_b = jax.random.split(key, 3)

    batch, in_features, out_features = 512, 256, 1
    x = jax.random.normal(k_x, (batch, in_features), dtype=jnp.float32)
    weights = jax.random.normal(k_w, (in_features,), dtype=jnp.float32)
    bias_term = jax.random.normal(k_b, (out_features,), dtype=jnp.float32)

    # Main path: single reduction step (nf == 1), batch split for megacore.
    y = jax.block_until_ready(linear_regression(x, weights, bias_term))
    y_ref = x @ weights + bias_term[0]
    assert y.shape == (batch,) and y.dtype == jnp.float32
    assert jnp.allclose(y, y_ref, atol=1e-3, rtol=1e-4), float(jnp.max(jnp.abs(y - y_ref)))

    # Ragged batch + ragged feature tail on the multi-step reduction path
    # (forced small tile_f to exercise the in-kernel masking, no x padding).
    xr = jax.random.normal(k_x, (300, 300), dtype=jnp.float32)
    wr = jax.random.normal(k_w, (300,), dtype=jnp.float32)
    yr = jax.block_until_ready(linear_regression(xr, wr, bias_term, tile_f_max=128))
    yr_ref = xr @ wr + bias_term[0]
    assert yr.shape == (300,)
    assert jnp.allclose(yr, yr_ref, atol=1e-3, rtol=1e-4), float(jnp.max(jnp.abs(yr - yr_ref)))

    # bf16 inputs stream narrow from HBM and are widened in-register.
    xb = x.astype(jnp.bfloat16)
    yb = jax.block_until_ready(linear_regression(xb, weights, bias_term))
    yb_ref = xb.astype(jnp.float32) @ weights + bias_term[0]
    assert jnp.allclose(yb, yb_ref, atol=2e-2, rtol=2e-2)

    # Tiny-batch XLA fallback, no bias.
    y2 = jax.block_until_ready(linear_regression(x[:8], weights, None))
    assert jnp.allclose(y2, x[:8] @ weights, atol=1e-3, rtol=1e-4)

    print("KERNEL_OK")
</pallas_src>

<mosaic_0001>
module attributes {stable_mosaic.version = 11 : i64} {
  func.func @_single_step_kernel(%arg0: i32, %arg1: i32, %arg2: memref<256x256xf32, #tpu.memory_space<vmem>>, %arg3: memref<1x256xf32, #tpu.memory_space<vmem>>, %arg4: memref<1xf32, #tpu.memory_space<smem>>, %arg5: memref<1x256xf32, #tpu.memory_space<vmem>>) attributes {dimension_semantics = [#tpu.dimension_semantics<parallel>, #tpu.dimension_semantics<arbitrary>], iteration_bounds = array<i64: 2, 1>, scalar_prefetch = 0 : i64, scratch_operands = 0 : i64, tpu.core_type = #tpu.core_type<tc>, window_params = [{transform_indices = @transform_0, window_bounds = array<i64: 256, 256>}, {transform_indices = @transform_1, window_bounds = array<i64: 1, 256>}, {transform_indices = @transform_2, window_bounds = array<i64: 1>}, {transform_indices = @transform_3, window_bounds = array<i64: 1, 256>}]} {
    %c0 = arith.constant 0 : index
    %c0_0 = arith.constant 0 : index
    %0 = vector.load %arg2[%c0, %c0_0] : memref<256x256xf32, #tpu.memory_space<vmem>>, vector<256x256xf32>
    %c0_1 = arith.constant 0 : index
    %c0_2 = arith.constant 0 : index
    %1 = vector.load %arg3[%c0_1, %c0_2] : memref<1x256xf32, #tpu.memory_space<vmem>>, vector<1x256xf32>
    %2 = vector.broadcast %1 : vector<1x256xf32> to vector<256x256xf32>
    %3 = arith.mulf %0, %2 : vector<256x256xf32>
    %cst = arith.constant dense<0.000000e+00> : vector<256xf32>
    %4 = vector.multi_reduction <add>, %3, %cst [1] : vector<256x256xf32> to vector<256xf32>
    %c0_3 = arith.constant 0 : index
    %5 = memref.load %arg4[%c0_3] : memref<1xf32, #tpu.memory_space<smem>>
    %6 = vector.broadcast %5 : f32 to vector<256xf32>
    %7 = arith.addf %4, %6 : vector<256xf32>
    %c0_4 = arith.constant 0 : index
    %c0_5 = arith.constant 0 : index
    %8 = vector.load %arg5[%c0_4, %c0_5] : memref<1x256xf32, #tpu.memory_space<vmem>>, vector<1x256xf32>
    %9 = vector.shape_cast %8 : vector<1x256xf32> to vector<256xf32>
    %10 = vector.shape_cast %7 : vector<256xf32> to vector<1x256xf32>
    tpu.vector_store %arg5[%c0_4, %c0_5], %10 {strides = array<i32>} : memref<1x256xf32, #tpu.memory_space<vmem>>, vector<1x256xf32>,
    return
  }
  func.func @transform_0(%arg0: i32, %arg1: i32) -> (i32, i32) {
    %c0_i32 = arith.constant 0 : i32
    return %arg0, %arg1 : i32, i32
  }
  func.func @transform_1(%arg0: i32, %arg1: i32) -> (i32, i32) {
    %c0_i32 = arith.constant 0 : i32
    %c0_i32_0 = arith.constant 0 : i32
    return %c0_i32, %arg1 : i32, i32
  }
  func.func @transform_2(%arg0: i32, %arg1: i32) -> i32 {
    %c0_i32 = arith.constant 0 : i32
    %c0_i32_0 = arith.constant 0 : i32
    return %c0_i32 : i32
  }
  func.func @transform_3(%arg0: i32, %arg1: i32) -> (i32, i32) {
    %c0_i32 = arith.constant 0 : i32
    %c0_i32_0 = arith.constant 0 : i32
    return %c0_i32, %arg0 : i32, i32
  }
}

</mosaic_0001>

<llo_original>
// kernel: tpu_custom_call.1
$region0: #{tpu_custom_call.1}
  #allocation0 [shape = 'u32[]', space=smem, size = 0x4, offset = 0x4, fixed_abs, tag = 'smem constant byte address 0x4 - core index']
  #allocation1 [shape = 'u32[144,128]{1,0:T(1,128)}', space=vmem, size = 0x12000, scoped, tag = 'internal scratch']
  #allocation2 [shape = 'f32[1]{0:T(128)S(6)}', space=smem, size = 0x200, scoped, tag = 'scoped memory for tpu_custom_call.1']
  %s0 = inlined_call_operand.hbm [shape: f32[512,256], index: 0, kind: input, shape index: {}]
  %s1 = inlined_call_operand.vmem [shape: f32[1,256], index: 1, kind: input, shape index: {}]
  %s2 = inlined_call_operand.<no memory space> [shape: f32[1], index: 2, kind: input, shape index: {}]
  %s3 = inlined_call_operand.hbm [shape: f32[1,512], index: 3, kind: output, shape index: {}]
  %s4 = sld [smem:[#allocation0]]
  $region49: #{tpu_custom_call.1} parent=0
    _
  %s6 = ssub.s32 1, %s4
  %s7 = scalar_select 0, %s6, %s4
  %8 = sst [smem:[#allocation2]] %s2
  $region1: #{tpu_custom_call.1} parent=0
    #allocation3 [shape = 'u8[524288]{0}', space=vmem, size = 0x80000, scoped, tag = 'input window, operand 0']
    #allocation4 [shape = 's32[2]{0}', space=sflag, size = 0x8, scoped, tag = 'scoped memory for tpu_custom_call.1']
    #allocation5 [shape = 's32[2]{0}', space=sflag, size = 0x8, scoped, tag = 'scoped memory for tpu_custom_call.1']
    #allocation6 [shape = 'u8[2048]{0}', space=vmem, size = 0x800, scoped, tag = 'output window, operand 0']
    %9 = vsyncpa [#allocation4], 0
    %s10 = scalar_lea.sflag [#allocation4], 1
    %11 = vsyncpa %s10, 0
    %12 = vsyncpa [#allocation5], 0
    %s13 = scalar_lea.sflag [#allocation5], 1
    %14 = vsyncpa %s13, 0
    loop: start=0, step=1, limit=4
    $region2: #{tpu_custom_call.1} parent=1 // loop_pre_header
      _
    $region3: #{tpu_custom_call.1} parent=1 // loop_header
      %s16 = sphi 0, %s20
      %p17 = scmp.ge.s32.totalorder %s16, 4
      %s23 = sphi 0, %s35
      %s24 = sphi 0, %s31
      %s25 = sphi 0, %s23
      %s26 = sphi 0, %s24
      %s27 = sphi 0, %s25
      %s28 = sphi 0, %s26
      %s40 = sphi 0, %s42
      %s43 = sphi 0, %s40
      %s44 = sphi 0, %s43
      %s60 = sphi 0, %s44
      %s66 = sphi 0, %s68
      %s69 = sphi 0, %s66
      %s70 = sphi 0, %s69
      %s86 = sphi 0, %s70
      %s90 = sphi 0, %s90
      %s92 = sphi 0, %s90
      %s93 = sphi 0, %s92
      %s107 = sphi 0, %s93
      %s113 = sphi 0, %s115
      %s116 = sphi 0, %s113
      %s117 = sphi 0, %s116
      %s133 = sphi 0, %s117
    $region4: #{tpu_custom_call.1} parent=1 // loop_header_branch
      %19 = sbr.rel (%p17) target = $region8
    $region5: #{tpu_custom_call.1} parent=1 // loop_body
      %s21 = ssub.s32 %s16, 1
      %s22 = ssub.s32 %s16, 2
      %s29 = sadd.s32 1, %s24
      %p30 = scmp.ge.s32.totalorder %s29, 1
      %s31 = scalar_select %p30, 0, %s29
      %s32 = sadd.s32 1, %s23
      %s33 = scalar_select %p30, %s32, %s23
      %p34 = scmp.ge.s32.totalorder %s33, 2
      %s35 = scalar_select %p34, 0, %s33
      %s36 = ssub.s32 %s23, %s35
      %s37 = ssub.s32 %s24, %s31
      %s38 = sor.u32 %s36, %s37
      %p39 = scmp.eq.s32.totalorder %s38, 0
      %s41 = sadd.s32 %s40, 1
      %s42 = scalar_select %p39, %s40, %s41
      %p45 = pneg %p39
      %p46 = scmp.eq.s32.totalorder %s16, 1
      %p47 = por %p45, %p46
      %p48 = scmp.ne.s32.totalorder %s40, %s43
      %p49 = scmp.eq.s32.totalorder %s16, 0
      %p50 = por %p48, %p49
      %p51 = scmp.ne.s32.totalorder %s40, %s43
      %p52 = scmp.eq.s32.totalorder %s21, 1
      %p53 = por %p51, %p52
      %p54 = scmp.ne.s32.totalorder %s43, %s44
      %p55 = scmp.eq.s32.totalorder %s21, 0
      %p56 = por %p54, %p55
      %p57 = scmp.ne.s32.totalorder %s43, %s44
      %p58 = scmp.eq.s32.totalorder %s22, 1
      %p59 = por %p57, %p58
      %p61 = scmp.ne.s32.totalorder %s44, %s60
      %p62 = scmp.eq.s32.totalorder %s22, 0
      %p63 = por %p61, %p62
      %s64 = ssub.s32 %s24, %s31
      %p65 = scmp.eq.s32.totalorder %s64, 0
      %s67 = sadd.s32 %s66, 1
      %s68 = scalar_select %p65, %s66, %s67
      %p71 = pneg %p65
      %p72 = scmp.eq.s32.totalorder %s16, 1
      %p73 = por %p71, %p72
      %p74 = scmp.ne.s32.totalorder %s66, %s69
      %p75 = scmp.eq.s32.totalorder %s16, 0
      %p76 = por %p74, %p75
      %p77 = scmp.ne.s32.totalorder %s66, %s69
      %p78 = scmp.eq.s32.totalorder %s21, 1
      %p79 = por %p77, %p78
      %p80 = scmp.ne.s32.totalorder %s69, %s70
      %p81 = scmp.eq.s32.totalorder %s21, 0
      %p82 = por %p80, %p81
      %p83 = scmp.ne.s32.totalorder %s69, %s70
      %p84 = scmp.eq.s32.totalorder %s22, 1
      %p85 = por %p83, %p84
      %p87 = scmp.ne.s32.totalorder %s70, %s86
      %p88 = scmp.eq.s32.totalorder %s22, 0
      %p89 = por %p87, %p88
      %s91 = sadd.s32 %s90, 1
      %p94 = scmp.eq.s32.totalorder %s16, 1
      %p95 = scmp.ne.s32.totalorder %s90, %s92
      %p96 = scmp.eq.s32.totalorder %s16, 0
      %p97 = por %p95, %p96
      %p98 = scmp.ne.s32.totalorder %s90, %s92
      %p99 = scmp.eq.s32.totalorder %s21, 1
      %p100 = por %p98, %p99
      %p101 = scmp.ne.s32.totalorder %s92, %s93
      %p102 = scmp.eq.s32.totalorder %s21, 0
      %p103 = por %p101, %p102
      %p104 = scmp.ne.s32.totalorder %s92, %s93
      %p105 = scmp.eq.s32.totalorder %s22, 1
      %p106 = por %p104, %p105
      %p108 = scmp.ne.s32.totalorder %s93, %s107
      %p109 = scmp.eq.s32.totalorder %s22, 0
      %p110 = por %p108, %p109
      %s111 = ssub.s32 %s23, %s35
      %p112 = scmp.eq.s32.totalorder %s111, 0
      %s114 = sadd.s32 %s113, 1
      %s115 = scalar_select %p112, %s113, %s114
      %p118 = pneg %p112
      %p119 = scmp.eq.s32.totalorder %s16, 1
      %p120 = por %p118, %p119
      %p121 = scmp.ne.s32.totalorder %s113, %s116
      %p122 = scmp.eq.s32.totalorder %s16, 0
      %p123 = por %p121, %p122
      %p124 = scmp.ne.s32.totalorder %s113, %s116
      %p125 = scmp.eq.s32.totalorder %s21, 1
      %p126 = por %p124, %p125
      %p127 = scmp.ne.s32.totalorder %s116, %s117
      %p128 = scmp.eq.s32.totalorder %s21, 0
      %p129 = por %p127, %p128
      %p130 = scmp.ne.s32.totalorder %s116, %s117
      %p131 = scmp.eq.s32.totalorder %s22, 1
      %p132 = por %p130, %p131
      %p134 = scmp.ne.s32.totalorder %s117, %s133
      %p135 = scmp.eq.s32.totalorder %s22, 0
      %p136 = por %p134, %p135
      %p137 = scmp.le.s32.totalorder 1, %s16
      %p138 = scmp.lt.s32.totalorder %s16, 3
      %p139 = pnand %p137, %p138
      %p140 = pneg %p139
      // Predicated region
      $region9: #{tpu_custom_call.1} parent=5 // pred_check
        _
      $region10: #{tpu_custom_call.1} parent=5 // pred_check_branch
        %142 = sbr.rel (%p139) target = $region12
      $region11: #{tpu_custom_call.1} parent=5 // pred_region
        %s143 = ssub.s32 %s16, 1
        // Predicated region
        $region13: #{tpu_custom_call.1} parent=11 // pred_check
          %p144 = pneg %p82
        $region14: #{tpu_custom_call.1} parent=11 // pred_check_branch
          %146 = sbr.rel (%p144) target = $region16
        $region15: #{tpu_custom_call.1} parent=11 // pred_region
          %s147 = smul.u32 2, %s26
          %p148 = scmp.lt.s32.totalorder %s147, 1
          %s149 = scalar_select %p148, %s147, 1
          %s150 = scalar_lea.vmem %s1, %s149
          %s151 = smul.u32 2, %s26
        $region16: #{tpu_custom_call.1} parent=11 // pred_fallthru
          _
        // Predicated region
        $region17: #{tpu_custom_call.1} parent=11 // pred_check
          %p152 = pneg %p103
        $region18: #{tpu_custom_call.1} parent=11 // pred_check_branch
          %154 = sbr.rel (%p152) target = $region20
        $region19: #{tpu_custom_call.1} parent=11 // pred_region
          _
        $region20: #{tpu_custom_call.1} parent=11 // pred_fallthru
          _
      $region12: #{tpu_custom_call.1} parent=5 // pred_fallthru
        _
      %p155 = scmp.lt.s32.totalorder %s16, 2
      // Predicated region
      $region21: #{tpu_custom_call.1} parent=5 // pred_check
        %p156 = pneg %p155
      $region22: #{tpu_custom_call.1} parent=5 // pred_check_branch
        %158 = sbr.rel (%p156) target = $region24
      $region23: #{tpu_custom_call.1} parent=5 // pred_region
        // Predicated region
        $region25: #{tpu_custom_call.1} parent=23 // pred_check
          %p159 = pneg %p50
        $region26: #{tpu_custom_call.1} parent=23 // pred_check_branch
          %161 = sbr.rel (%p159) target = $region28
        $region27: #{tpu_custom_call.1} parent=23 // pred_region
          %s162 = sand.u32 %s40, 1
          %s163 = scalar_lea.sflag [#allocation4], %s162
          %s164 = sand.u32 %s40, 1
          %s165 = smul.addr %s164, 512
          %s166 = scalar_lea.vmem [#allocation3], %s165
          %s167 = smul.u32 32, %s23
          %s168 = smul.u32 2, %s24
          %s170 = ssub.s32 8192, 8192
          %171 = vsyncadd %s163, %s170
          %s172 = smul.addr %s167, 2
          %s173 = sadd.s32 %s168, %s172
          %s174 = smul.addr %s173, 128
          %s175 = scalar_lea.hbm %s0, %s174
          %s176 = sshll.u32 %s166, 4
          %s177 = int_to_ptr.vmem [resolvable:$true] %s176
          %182 = dma.hbm_to_vmem [thread:$0]  %s175, 8192, %s177, %s163, 256, 256, 16
        $region28: #{tpu_custom_call.1} parent=23 // pred_fallthru
          _
      $region24: #{tpu_custom_call.1} parent=5 // pred_fallthru
        _
      %p183 = scmp.le.s32.totalorder 1, %s16
      %p184 = scmp.lt.s32.totalorder %s16, 3
      %p185 = pnand %p183, %p184
      %p186 = pneg %p185
      // Predicated region
      $region29: #{tpu_custom_call.1} parent=5 // pred_check
        _
      $region30: #{tpu_custom_call.1} parent=5 // pred_check_branch
        %188 = sbr.rel (%p185) target = $region32
      $region31: #{tpu_custom_call.1} parent=5 // pred_region
        %s189 = ssub.s32 %s16, 1
        %s190 = sand.u32 %s43, 1
        %s191 = scalar_lea.sflag [#allocation4], %s190
        %s192 = sand.u32 %s43, 1
        %s193 = smul.addr %s192, 512
        %s194 = scalar_lea.vmem [#allocation3], %s193
        // Predicated region
        $region33: #{tpu_custom_call.1} parent=31 // pred_check
          %p195 = pneg %p56
        $region34: #{tpu_custom_call.1} parent=31 // pred_check_branch
          %197 = sbr.rel (%p195) target = $region36
        $region35: #{tpu_custom_call.1} parent=31 // pred_region
          %198 = dma.done %s191, 8192
        $region36: #{tpu_custom_call.1} parent=31 // pred_fallthru
          _
        %s199 = sand.u32 %s43, 1
        %s200 = scalar_lea.sflag [#allocation4], %s199
        %s201 = sand.u32 %s43, 1
        %s202 = smul.addr %s201, 512
        %s203 = scalar_lea.vmem [#allocation3], %s202
        %p204 = pneg %p56
        %p205 = pneg %p53
        %s206 = smul.u32 2, %s26
        %p207 = scmp.lt.s32.totalorder %s206, 1
        %s208 = scalar_select %p207, %s206, 1
        %s209 = scalar_lea.vmem %s1, %s208
        %p210 = pneg %p82
        %p211 = pneg %p79
        %p212 = pneg %p103
        %p213 = pneg %p100
        %p214 = pneg %p129
        %p215 = pneg %p126
        %s216 = sand.u32 %s116, 1
        %s217 = scalar_lea.sflag [#allocation5], %s216
        %s218 = sand.u32 %s116, 1
        %s219 = smul.addr %s218, 2
        %s220 = scalar_lea.vmem [#allocation6], %s219
        %s221 = smul.u32 32, %s25
        %s222 = smul.u32 2, %s26
        %s223 = smul.u32 2, %s26
        %p224 = scmp.lt.s32.totalorder %s223, 1
        %s225 = scalar_select %p224, %s223, 1
        %s226 = scalar_lea.vmem %s1, %s225
        %s227 = smul.u32 2, %s26
        %s228 = smul.u32 2, %s25
        %v229 = vld [vmem:[%s194] sm:$0xff]
        %v230 = vld [vmem:[%s194 + $0x8] sm:$0xff]
        %v231 = vld [vmem:[%s194 + $0x10] sm:$0xff]
        %v232 = vld [vmem:[%s194 + $0x18] sm:$0xff]
        %v233 = vld [vmem:[%s194 + $0x20] sm:$0xff]
        %v234 = vld [vmem:[%s194 + $0x28] sm:$0xff]
        %v235 = vld [vmem:[%s194 + $0x30] sm:$0xff]
        %v236 = vld [vmem:[%s194 + $0x38] sm:$0xff]
        %v237 = vld [vmem:[%s194 + $0x40] sm:$0xff]
        %v238 = vld [vmem:[%s194 + $0x48] sm:$0xff]
        %v239 = vld [vmem:[%s194 + $0x50] sm:$0xff]
        %v240 = vld [vmem:[%s194 + $0x58] sm:$0xff]
        %v241 = vld [vmem:[%s194 + $0x60] sm:$0xff]
        %v242 = vld [vmem:[%s194 + $0x68] sm:$0xff]
        %v243 = vld [vmem:[%s194 + $0x70] sm:$0xff]
        %v244 = vld [vmem:[%s194 + $0x78] sm:$0xff]
        %v245 = vld [vmem:[%s194 + $0x80] sm:$0xff]
        %v246 = vld [vmem:[%s194 + $0x88] sm:$0xff]
        %v247 = vld [vmem:[%s194 + $0x90] sm:$0xff]
        %v248 = vld [vmem:[%s194 + $0x98] sm:$0xff]
        %v249 = vld [vmem:[%s194 + $0xa0] sm:$0xff]
        %v250 = vld [vmem:[%s194 + $0xa8] sm:$0xff]
        %v251 = vld [vmem:[%s194 + $0xb0] sm:$0xff]
        %v252 = vld [vmem:[%s194 + $0xb8] sm:$0xff]
        %v253 = vld [vmem:[%s194 + $0xc0] sm:$0xff]
        %v254 = vld [vmem:[%s194 + $0xc8] sm:$0xff]
        %v255 = vld [vmem:[%s194 + $0xd0] sm:$0xff]
        %v256 = vld [vmem:[%s194 + $0xd8] sm:$0xff]
        %v257 = vld [vmem:[%s194 + $0xe0] sm:$0xff]
        %v258 = vld [vmem:[%s194 + $0xe8] sm:$0xff]
        %v259 = vld [vmem:[%s194 + $0xf0] sm:$0xff]
        %v260 = vld [vmem:[%s194 + $0xf8] sm:$0xff]
        %v261 = vld [vmem:[%s194 + $0x100] sm:$0xff]
        %v262 = vld [vmem:[%s194 + $0x108] sm:$0xff]
        %v263 = vld [vmem:[%s194 + $0x110] sm:$0xff]
        %v264 = vld [vmem:[%s194 + $0x118] sm:$0xff]
        %v265 = vld [vmem:[%s194 + $0x120] sm:$0xff]
        %v266 = vld [vmem:[%s194 + $0x128] sm:$0xff]
        %v267 = vld [vmem:[%s194 + $0x130] sm:$0xff]
        %v268 = vld [vmem:[%s194 + $0x138] sm:$0xff]
        %v269 = vld [vmem:[%s194 + $0x140] sm:$0xff]
        %v270 = vld [vmem:[%s194 + $0x148] sm:$0xff]
        %v271 = vld [vmem:[%s194 + $0x150] sm:$0xff]
        %v272 = vld [vmem:[%s194 + $0x158] sm:$0xff]
        %v273 = vld [vmem:[%s194 + $0x160] sm:$0xff]
        %v274 = vld [vmem:[%s194 + $0x168] sm:$0xff]
        %v275 = vld [vmem:[%s194 + $0x170] sm:$0xff]
        %v276 = vld [vmem:[%s194 + $0x178] sm:$0xff]
        %v277 = vld [vmem:[%s194 + $0x180] sm:$0xff]
        %v278 = vld [vmem:[%s194 + $0x188] sm:$0xff]
        %v279 = vld [vmem:[%s194 + $0x190] sm:$0xff]
        %v280 = vld [vmem:[%s194 + $0x198] sm:$0xff]
        %v281 = vld [vmem:[%s194 + $0x1a0] sm:$0xff]
        %v282 = vld [vmem:[%s194 + $0x1a8] sm:$0xff]
        %v283 = vld [vmem:[%s194 + $0x1b0] sm:$0xff]
        %v284 = vld [vmem:[%s194 + $0x1b8] sm:$0xff]
        %v285 = vld [vmem:[%s194 + $0x1c0] sm:$0xff]
        %v286 = vld [vmem:[%s194 + $0x1c8] sm:$0xff]
        %v287 = vld [vmem:[%s194 + $0x1d0] sm:$0xff]
        %v288 = vld [vmem:[%s194 + $0x1d8] sm:$0xff]
        %v289 = vld [vmem:[%s194 + $0x1e0] sm:$0xff]
        %v290 = vld [vmem:[%s194 + $0x1e8] sm:$0xff]
        %v291 = vld [vmem:[%s194 + $0x1f0] sm:$0xff]
        %v292 = vld [vmem:[%s194 + $0x1f8] sm:$0xff]
        %v293 = vld [vmem:[%s226] sm:$0x3]
        %v295 = vlaneseq
        %v296 = vshrl.u32 %v295, 7
        %v297 = vsub.s32 0, %v296
        %v298 = vrot.slane %v293, %v297
        %v299 = vlaneseq
        %v300 = vshrl.u32 %v299, 7
        %v301 = vsub.s32 1, %v300
        %v302 = vrot.slane %v293, %v301
        %v305 = vmul.f32 %v229, %v298
        %v306 = vmul.f32 %v230, %v302
        %v307 = vmul.f32 %v231, %v298
        %v308 = vmul.f32 %v232, %v302
        %v309 = vmul.f32 %v233, %v298
        %v310 = vmul.f32 %v234, %v302
        %v311 = vmul.f32 %v235, %v298
        %v312 = vmul.f32 %v236, %v302
        %v313 = vmul.f32 %v237, %v298
        %v314 = vmul.f32 %v238, %v302
        %v315 = vmul.f32 %v239, %v298
        %v316 = vmul.f32 %v240, %v302
        %v317 = vmul.f32 %v241, %v298
        %v318 = vmul.f32 %v242, %v302
        %v319 = vmul.f32 %v243, %v298
        %v320 = vmul.f32 %v244, %v302
        %v321 = vmul.f32 %v245, %v298
        %v322 = vmul.f32 %v246, %v302
        %v323 = vmul.f32 %v247, %v298
        %v324 = vmul.f32 %v248, %v302
        %v325 = vmul.f32 %v249, %v298
        %v326 = vmul.f32 %v250, %v302
        %v327 = vmul.f32 %v251, %v298
        %v328 = vmul.f32 %v252, %v302
        %v329 = vmul.f32 %v253, %v298
        %v330 = vmul.f32 %v254, %v302
        %v331 = vmul.f32 %v255, %v298
        %v332 = vmul.f32 %v256, %v302
        %v333 = vmul.f32 %v257, %v298
        %v334 = vmul.f32 %v258, %v302
        %v335 = vmul.f32 %v259, %v298
        %v336 = vmul.f32 %v260, %v302
        %v337 = vmul.f32 %v261, %v298
        %v338 = vmul.f32 %v262, %v302
        %v339 = vmul.f32 %v263, %v298
        %v340 = vmul.f32 %v264, %v302
        %v341 = vmul.f32 %v265, %v298
        %v342 = vmul.f32 %v266, %v302
        %v343 = vmul.f32 %v267, %v298
        %v344 = vmul.f32 %v268, %v302
        %v345 = vmul.f32 %v269, %v298
        %v346 = vmul.f32 %v270, %v302
        %v347 = vmul.f32 %v271, %v298
        %v348 = vmul.f32 %v272, %v302
        %v349 = vmul.f32 %v273, %v298
        %v350 = vmul.f32 %v274, %v302
        %v351 = vmul.f32 %v275, %v298
        %v352 = vmul.f32 %v276, %v302
        %v353 = vmul.f32 %v277, %v298
        %v354 = vmul.f32 %v278, %v302
        %v355 = vmul.f32 %v279, %v298
        %v356 = vmul.f32 %v280, %v302
        %v357 = vmul.f32 %v281, %v298
        %v358 = vmul.f32 %v282, %v302
        %v359 = vmul.f32 %v283, %v298
        %v360 = vmul.f32 %v284, %v302
        %v361 = vmul.f32 %v285, %v298
        %v362 = vmul.f32 %v286, %v302
        %v363 = vmul.f32 %v287, %v298
        %v364 = vmul.f32 %v288, %v302
        %v365 = vmul.f32 %v289, %v298
        %v366 = vmul.f32 %v290, %v302
        %v367 = vmul.f32 %v291, %v298
        %v368 = vmul.f32 %v292, %v302
        %v369 = vadd.f32 %v305, %v306
        %370 = vadd.xlane.f32.xlu0 %v369
        %v371 = vpop.xlane.xlu0 %370
        %v372 = vadd.f32 %v307, %v308
        %373 = vadd.xlane.f32.xlu0 %v372
        %v374 = vpop.xlane.xlu0 %373
        %v375 = vadd.f32 %v309, %v310
        %376 = vadd.xlane.f32.xlu0 %v375
        %v377 = vpop.xlane.xlu0 %376
        %v378 = vadd.f32 %v311, %v312
        %379 = vadd.xlane.f32.xlu0 %v378
        %v380 = vpop.xlane.xlu0 %379
        %v381 = vadd.f32 %v313, %v314
        %382 = vadd.xlane.f32.xlu0 %v381
        %v383 = vpop.xlane.xlu0 %382
        %v384 = vadd.f32 %v315, %v316
        %385 = vadd.xlane.f32.xlu0 %v384
        %v386 = vpop.xlane.xlu0 %385
        %v387 = vadd.f32 %v317, %v318
        %388 = vadd.xlane.f32.xlu0 %v387
        %v389 = vpop.xlane.xlu0 %388
        %v390 = vadd.f32 %v319, %v320
        %391 = vadd.xlane.f32.xlu0 %v390
        %v392 = vpop.xlane.xlu0 %391
        %v393 = vadd.f32 %v321, %v322
        %394 = vadd.xlane.f32.xlu0 %v393
        %v395 = vpop.xlane.xlu0 %394
        %v396 = vadd.f32 %v323, %v324
        %397 = vadd.xlane.f32.xlu0 %v396
        %v398 = vpop.xlane.xlu0 %397
        %v399 = vadd.f32 %v325, %v326
        %400 = vadd.xlane.f32.xlu0 %v399
        %v401 = vpop.xlane.xlu0 %400
        %v402 = vadd.f32 %v327, %v328
        %403 = vadd.xlane.f32.xlu0 %v402
        %v404 = vpop.xlane.xlu0 %403
        %v405 = vadd.f32 %v329, %v330
        %406 = vadd.xlane.f32.xlu0 %v405
        %v407 = vpop.xlane.xlu0 %406
        %v408 = vadd.f32 %v331, %v332
        %409 = vadd.xlane.f32.xlu0 %v408
        %v410 = vpop.xlane.xlu0 %409
        %v411 = vadd.f32 %v333, %v334
        %412 = vadd.xlane.f32.xlu0 %v411
        %v413 = vpop.xlane.xlu0 %412
        %v414 = vadd.f32 %v335, %v336
        %415 = vadd.xlane.f32.xlu0 %v414
        %v416 = vpop.xlane.xlu0 %415
        %v417 = vadd.f32 %v337, %v338
        %418 = vadd.xlane.f32.xlu0 %v417
        %v419 = vpop.xlane.xlu0 %418
        %v420 = vadd.f32 %v339, %v340
        %421 = vadd.xlane.f32.xlu0 %v420
        %v422 = vpop.xlane.xlu0 %421
        %v423 = vadd.f32 %v341, %v342
        %424 = vadd.xlane.f32.xlu0 %v423
        %v425 = vpop.xlane.xlu0 %424
        %v426 = vadd.f32 %v343, %v344
        %427 = vadd.xlane.f32.xlu0 %v426
        %v428 = vpop.xlane.xlu0 %427
        %v429 = vadd.f32 %v345, %v346
        %430 = vadd.xlane.f32.xlu0 %v429
        %v431 = vpop.xlane.xlu0 %430
        %v432 = vadd.f32 %v347, %v348
        %433 = vadd.xlane.f32.xlu0 %v432
        %v434 = vpop.xlane.xlu0 %433
        %v435 = vadd.f32 %v349, %v350
        %436 = vadd.xlane.f32.xlu0 %v435
        %v437 = vpop.xlane.xlu0 %436
        %v438 = vadd.f32 %v351, %v352
        %439 = vadd.xlane.f32.xlu0 %v438
        %v440 = vpop.xlane.xlu0 %439
        %v441 = vadd.f32 %v353, %v354
        %442 = vadd.xlane.f32.xlu0 %v441
        %v443 = vpop.xlane.xlu0 %442
        %v444 = vadd.f32 %v355, %v356
        %445 = vadd.xlane.f32.xlu0 %v444
        %v446 = vpop.xlane.xlu0 %445
        %v447 = vadd.f32 %v357, %v358
        %448 = vadd.xlane.f32.xlu0 %v447
        %v449 = vpop.xlane.xlu0 %448
        %v450 = vadd.f32 %v359, %v360
        %451 = vadd.xlane.f32.xlu0 %v450
        %v452 = vpop.xlane.xlu0 %451
        %v453 = vadd.f32 %v361, %v362
        %454 = vadd.xlane.f32.xlu0 %v453
        %v455 = vpop.xlane.xlu0 %454
        %v456 = vadd.f32 %v363, %v364
        %457 = vadd.xlane.f32.xlu0 %v456
        %v458 = vpop.xlane.xlu0 %457
        %v459 = vadd.f32 %v365, %v366
        %460 = vadd.xlane.f32.xlu0 %v459
        %v461 = vpop.xlane.xlu0 %460
        %v462 = vadd.f32 %v367, %v368
        %463 = vadd.xlane.f32.xlu0 %v462
        %v464 = vpop.xlane.xlu0 %463
        %s465 = sld [smem:[#allocation2]]
        %v466 = vstv %s465
        %v467 = vadd.f32 %v371, %v466
        %v468 = vadd.f32 %v374, %v466
        %v469 = vadd.f32 %v377, %v466
        %v470 = vadd.f32 %v380, %v466
        %v471 = vadd.f32 %v383, %v466
        %v472 = vadd.f32 %v386, %v466
        %v473 = vadd.f32 %v389, %v466
        %v474 = vadd.f32 %v392, %v466
        %v475 = vadd.f32 %v395, %v466
        %v476 = vadd.f32 %v398, %v466
        %v477 = vadd.f32 %v401, %v466
        %v478 = vadd.f32 %v404, %v466
        %v479 = vadd.f32 %v407, %v466
        %v480 = vadd.f32 %v410, %v466
        %v481 = vadd.f32 %v413, %v466
        %v482 = vadd.f32 %v416, %v466
        %v483 = vadd.f32 %v419, %v466
        %v484 = vadd.f32 %v422, %v466
        %v485 = vadd.f32 %v425, %v466
        %v486 = vadd.f32 %v428, %v466
        %v487 = vadd.f32 %v431, %v466
        %v488 = vadd.f32 %v434, %v466
        %v489 = vadd.f32 %v437, %v466
        %v490 = vadd.f32 %v440, %v466
        %v491 = vadd.f32 %v443, %v466
        %v492 = vadd.f32 %v446, %v466
        %v493 = vadd.f32 %v449, %v466
        %v494 = vadd.f32 %v452, %v466
        %v495 = vadd.f32 %v455, %v466
        %v496 = vadd.f32 %v458, %v466
        %v497 = vadd.f32 %v461, %v466
        %v498 = vadd.f32 %v464, %v466
        %v531 = vlaneseq
        %v532 = vshrl.u32 %v531, 7
        %v533 = vsub.s32 0, %v532
        %v534 = vrot.slane %v467, %v533
        %v535 = vlaneseq
        %v536 = vshrl.u32 %v535, 7
        %v537 = vsub.s32 1, %v536
        %v538 = vrot.slane %v467, %v537
        %v539 = vlaneseq
        %v540 = vshrl.u32 %v539, 7
        %v541 = vsub.s32 2, %v540
        %v542 = vrot.slane %v467, %v541
        %v543 = vlaneseq
        %v544 = vshrl.u32 %v543, 7
        %v545 = vsub.s32 3, %v544
        %v546 = vrot.slane %v467, %v545
        %v547 = vlaneseq
        %v548 = vshrl.u32 %v547, 7
        %v549 = vsub.s32 4, %v548
        %v550 = vrot.slane %v467, %v549
        %v551 = vlaneseq
        %v552 = vshrl.u32 %v551, 7
        %v553 = vsub.s32 5, %v552
        %v554 = vrot.slane %v467, %v553
        %v555 = vlaneseq
        %v556 = vshrl.u32 %v555, 7
        %v557 = vsub.s32 6, %v556
        %v558 = vrot.slane %v467, %v557
        %v559 = vlaneseq
        %v560 = vshrl.u32 %v559, 7
        %v561 = vsub.s32 7, %v560
        %v562 = vrot.slane %v467, %v561
        %v563 = vlaneseq
        %v564 = vshrl.u32 %v563, 7
        %v565 = vsub.s32 0, %v564
        %v566 = vrot.slane %v468, %v565
        %v567 = vlaneseq
        %v568 = vshrl.u32 %v567, 7
        %v569 = vsub.s32 1, %v568
        %v570 = vrot.slane %v468, %v569
        %v571 = vlaneseq
        %v572 = vshrl.u32 %v571, 7
        %v573 = vsub.s32 2, %v572
        %v574 = vrot.slane %v468, %v573
        %v575 = vlaneseq
        %v576 = vshrl.u32 %v575, 7
        %v577 = vsub.s32 3, %v576
        %v578 = vrot.slane %v468, %v577
        %v579 = vlaneseq
        %v580 = vshrl.u32 %v579, 7
        %v581 = vsub.s32 4, %v580
        %v582 = vrot.slane %v468, %v581
        %v583 = vlaneseq
        %v584 = vshrl.u32 %v583, 7
        %v585 = vsub.s32 5, %v584
        %v586 = vrot.slane %v468, %v585
        %v587 = vlaneseq
        %v588 = vshrl.u32 %v587, 7
        %v589 = vsub.s32 6, %v588
        %v590 = vrot.slane %v468, %v589
        %v591 = vlaneseq
        %v592 = vshrl.u32 %v591, 7
        %v593 = vsub.s32 7, %v592
        %v594 = vrot.slane %v468, %v593
        %v595 = vlaneseq
        %v596 = vshrl.u32 %v595, 7
        %v597 = vsub.s32 0, %v596
        %v598 = vrot.slane %v469, %v597
        %v599 = vlaneseq
        %v600 = vshrl.u32 %v599, 7
        %v601 = vsub.s32 1, %v600
        %v602 = vrot.slane %v469, %v601
        %v603 = vlaneseq
        %v604 = vshrl.u32 %v603, 7
        %v605 = vsub.s32 2, %v604
        %v606 = vrot.slane %v469, %v605
        %v607 = vlaneseq
        %v608 = vshrl.u32 %v607, 7
        %v609 = vsub.s32 3, %v608
        %v610 = vrot.slane %v469, %v609
        %v611 = vlaneseq
        %v612 = vshrl.u32 %v611, 7
        %v613 = vsub.s32 4, %v612
        %v614 = vrot.slane %v469, %v613
        %v615 = vlaneseq
        %v616 = vshrl.u32 %v615, 7
        %v617 = vsub.s32 5, %v616
        %v618 = vrot.slane %v469, %v617
        %v619 = vlaneseq
        %v620 = vshrl.u32 %v619, 7
        %v621 = vsub.s32 6, %v620
        %v622 = vrot.slane %v469, %v621
        %v623 = vlaneseq
        %v624 = vshrl.u32 %v623, 7
        %v625 = vsub.s32 7, %v624
        %v626 = vrot.slane %v469, %v625
        %v627 = vlaneseq
        %v628 = vshrl.u32 %v627, 7
        %v629 = vsub.s32 0, %v628
        %v630 = vrot.slane %v470, %v629
        %v631 = vlaneseq
        %v632 = vshrl.u32 %v631, 7
        %v633 = vsub.s32 1, %v632
        %v634 = vrot.slane %v470, %v633
        %v635 = vlaneseq
        %v636 = vshrl.u32 %v635, 7
        %v637 = vsub.s32 2, %v636
        %v638 = vrot.slane %v470, %v637
        %v639 = vlaneseq
        %v640 = vshrl.u32 %v639, 7
        %v641 = vsub.s32 3, %v640
        %v642 = vrot.slane %v470, %v641
        %v643 = vlaneseq
        %v644 = vshrl.u32 %v643, 7
        %v645 = vsub.s32 4, %v644
        %v646 = vrot.slane %v470, %v645
        %v647 = vlaneseq
        %v648 = vshrl.u32 %v647, 7
        %v649 = vsub.s32 5, %v648
        %v650 = vrot.slane %v470, %v649
        %v651 = vlaneseq
        %v652 = vshrl.u32 %v651, 7
        %v653 = vsub.s32 6, %v652
        %v654 = vrot.slane %v470, %v653
        %v655 = vlaneseq
        %v656 = vshrl.u32 %v655, 7
        %v657 = vsub.s32 7, %v656
        %v658 = vrot.slane %v470, %v657
        %v659 = vlaneseq
        %v660 = vshrl.u32 %v659, 7
        %v661 = vsub.s32 0, %v660
        %v662 = vrot.slane %v471, %v661
        %v663 = vlaneseq
        %v664 = vshrl.u32 %v663, 7
        %v665 = vsub.s32 1, %v664
        %v666 = vrot.slane %v471, %v665
        %v667 = vlaneseq
        %v668 = vshrl.u32 %v667, 7
        %v669 = vsub.s32 2, %v668
        %v670 = vrot.slane %v471, %v669
        %v671 = vlaneseq
        %v672 = vshrl.u32 %v671, 7
        %v673 = vsub.s32 3, %v672
        %v674 = vrot.slane %v471, %v673
        %v675 = vlaneseq
        %v676 = vshrl.u32 %v675, 7
        %v677 = vsub.s32 4, %v676
        %v678 = vrot.slane %v471, %v677
        %v679 = vlaneseq
        %v680 = vshrl.u32 %v679, 7
        %v681 = vsub.s32 5, %v680
        %v682 = vrot.slane %v471, %v681
        %v683 = vlaneseq
        %v684 = vshrl.u32 %v683, 7
        %v685 = vsub.s32 6, %v684
        %v686 = vrot.slane %v471, %v685
        %v687 = vlaneseq
        %v688 = vshrl.u32 %v687, 7
        %v689 = vsub.s32 7, %v688
        %v690 = vrot.slane %v471, %v689
        %v691 = vlaneseq
        %v692 = vshrl.u32 %v691, 7
        %v693 = vsub.s32 0, %v692
        %v694 = vrot.slane %v472, %v693
        %v695 = vlaneseq
        %v696 = vshrl.u32 %v695, 7
        %v697 = vsub.s32 1, %v696
        %v698 = vrot.slane %v472, %v697
        %v699 = vlaneseq
        %v700 = vshrl.u32 %v699, 7
        %v701 = vsub.s32 2, %v700
        %v702 = vrot.slane %v472, %v701
        %v703 = vlaneseq
        %v704 = vshrl.u32 %v703, 7
        %v705 = vsub.s32 3, %v704
        %v706 = vrot.slane %v472, %v705
        %v707 = vlaneseq
        %v708 = vshrl.u32 %v707, 7
        %v709 = vsub.s32 4, %v708
        %v710 = vrot.slane %v472, %v709
        %v711 = vlaneseq
        %v712 = vshrl.u32 %v711, 7
        %v713 = vsub.s32 5, %v712
        %v714 = vrot.slane %v472, %v713
        %v715 = vlaneseq
        %v716 = vshrl.u32 %v715, 7
        %v717 = vsub.s32 6, %v716
        %v718 = vrot.slane %v472, %v717
        %v719 = vlaneseq
        %v720 = vshrl.u32 %v719, 7
        %v721 = vsub.s32 7, %v720
        %v722 = vrot.slane %v472, %v721
        %v723 = vlaneseq
        %v724 = vshrl.u32 %v723, 7
        %v725 = vsub.s32 0, %v724
        %v726 = vrot.slane %v473, %v725
        %v727 = vlaneseq
        %v728 = vshrl.u32 %v727, 7
        %v729 = vsub.s32 1, %v728
        %v730 = vrot.slane %v473, %v729
        %v731 = vlaneseq
        %v732 = vshrl.u32 %v731, 7
        %v733 = vsub.s32 2, %v732
        %v734 = vrot.slane %v473, %v733
        %v735 = vlaneseq
        %v736 = vshrl.u32 %v735, 7
        %v737 = vsub.s32 3, %v736
        %v738 = vrot.slane %v473, %v737
        %v739 = vlaneseq
        %v740 = vshrl.u32 %v739, 7
        %v741 = vsub.s32 4, %v740
        %v742 = vrot.slane %v473, %v741
        %v743 = vlaneseq
        %v744 = vshrl.u32 %v743, 7
        %v745 = vsub.s32 5, %v744
        %v746 = vrot.slane %v473, %v745
        %v747 = vlaneseq
        %v748 = vshrl.u32 %v747, 7
        %v749 = vsub.s32 6, %v748
        %v750 = vrot.slane %v473, %v749
        %v751 = vlaneseq
        %v752 = vshrl.u32 %v751, 7
        %v753 = vsub.s32 7, %v752
        %v754 = vrot.slane %v473, %v753
        %v755 = vlaneseq
        %v756 = vshrl.u32 %v755, 7
        %v757 = vsub.s32 0, %v756
        %v758 = vrot.slane %v474, %v757
        %v759 = vlaneseq
        %v760 = vshrl.u32 %v759, 7
        %v761 = vsub.s32 1, %v760
        %v762 = vrot.slane %v474, %v761
        %v763 = vlaneseq
        %v764 = vshrl.u32 %v763, 7
        %v765 = vsub.s32 2, %v764
        %v766 = vrot.slane %v474, %v765
        %v767 = vlaneseq
        %v768 = vshrl.u32 %v767, 7
        %v769 = vsub.s32 3, %v768
        %v770 = vrot.slane %v474, %v769
        %v771 = vlaneseq
        %v772 = vshrl.u32 %v771, 7
        %v773 = vsub.s32 4, %v772
        %v774 = vrot.slane %v474, %v773
        %v775 = vlaneseq
        %v776 = vshrl.u32 %v775, 7
        %v777 = vsub.s32 5, %v776
        %v778 = vrot.slane %v474, %v777
        %v779 = vlaneseq
        %v780 = vshrl.u32 %v779, 7
        %v781 = vsub.s32 6, %v780
        %v782 = vrot.slane %v474, %v781
        %v783 = vlaneseq
        %v784 = vshrl.u32 %v783, 7
        %v785 = vsub.s32 7, %v784
        %v786 = vrot.slane %v474, %v785
        %v787 = vlaneseq
        %v788 = vshrl.u32 %v787, 7
        %v789 = vsub.s32 0, %v788
        %v790 = vrot.slane %v475, %v789
        %v791 = vlaneseq
        %v792 = vshrl.u32 %v791, 7
        %v793 = vsub.s32 1, %v792
        %v794 = vrot.slane %v475, %v793
        %v795 = vlaneseq
        %v796 = vshrl.u32 %v795, 7
        %v797 = vsub.s32 2, %v796
        %v798 = vrot.slane %v475, %v797
        %v799 = vlaneseq
        %v800 = vshrl.u32 %v799, 7
        %v801 = vsub.s32 3, %v800
        %v802 = vrot.slane %v475, %v801
        %v803 = vlaneseq
        %v804 = vshrl.u32 %v803, 7
        %v805 = vsub.s32 4, %v804
        %v806 = vrot.slane %v475, %v805
        %v807 = vlaneseq
        %v808 = vshrl.u32 %v807, 7
        %v809 = vsub.s32 5, %v808
        %v810 = vrot.slane %v475, %v809
        %v811 = vlaneseq
        %v812 = vshrl.u32 %v811, 7
        %v813 = vsub.s32 6, %v812
        %v814 = vrot.slane %v475, %v813
        %v815 = vlaneseq
        %v816 = vshrl.u32 %v815, 7
        %v817 = vsub.s32 7, %v816
        %v818 = vrot.slane %v475, %v817
        %v819 = vlaneseq
        %v820 = vshrl.u32 %v819, 7
        %v821 = vsub.s32 0, %v820
        %v822 = vrot.slane %v476, %v821
        %v823 = vlaneseq
        %v824 = vshrl.u32 %v823, 7
        %v825 = vsub.s32 1, %v824
        %v826 = vrot.slane %v476, %v825
        %v827 = vlaneseq
        %v828 = vshrl.u32 %v827, 7
        %v829 = vsub.s32 2, %v828
        %v830 = vrot.slane %v476, %v829
        %v831 = vlaneseq
        %v832 = vshrl.u32 %v831, 7
        %v833 = vsub.s32 3, %v832
        %v834 = vrot.slane %v476, %v833
        %v835 = vlaneseq
        %v836 = vshrl.u32 %v835, 7
        %v837 = vsub.s32 4, %v836
        %v838 = vrot.slane %v476, %v837
        %v839 = vlaneseq
        %v840 = vshrl.u32 %v839, 7
        %v841 = vsub.s32 5, %v840
        %v842 = vrot.slane %v476, %v841
        %v843 = vlaneseq
        %v844 = vshrl.u32 %v843, 7
        %v845 = vsub.s32 6, %v844
        %v846 = vrot.slane %v476, %v845
        %v847 = vlaneseq
        %v848 = vshrl.u32 %v847, 7
        %v849 = vsub.s32 7, %v848
        %v850 = vrot.slane %v476, %v849
        %v851 = vlaneseq
        %v852 = vshrl.u32 %v851, 7
        %v853 = vsub.s32 0, %v852
        %v854 = vrot.slane %v477, %v853
        %v855 = vlaneseq
        %v856 = vshrl.u32 %v855, 7
        %v857 = vsub.s32 1, %v856
        %v858 = vrot.slane %v477, %v857
        %v859 = vlaneseq
        %v860 = vshrl.u32 %v859, 7
        %v861 = vsub.s32 2, %v860
        %v862 = vrot.slane %v477, %v861
        %v863 = vlaneseq
        %v864 = vshrl.u32 %v863, 7
        %v865 = vsub.s32 3, %v864
        %v866 = vrot.slane %v477, %v865
        %v867 = vlaneseq
        %v868 = vshrl.u32 %v867, 7
        %v869 = vsub.s32 4, %v868
        %v870 = vrot.slane %v477, %v869
        %v871 = vlaneseq
        %v872 = vshrl.u32 %v871, 7
        %v873 = vsub.s32 5, %v872
        %v874 = vrot.slane %v477, %v873
        %v875 = vlaneseq
        %v876 = vshrl.u32 %v875, 7
        %v877 = vsub.s32 6, %v876
        %v878 = vrot.slane %v477, %v877
        %v879 = vlaneseq
        %v880 = vshrl.u32 %v879, 7
        %v881 = vsub.s32 7, %v880
        %v882 = vrot.slane %v477, %v881
        %v883 = vlaneseq
        %v884 = vshrl.u32 %v883, 7
        %v885 = vsub.s32 0, %v884
        %v886 = vrot.slane %v478, %v885
        %v887 = vlaneseq
        %v888 = vshrl.u32 %v887, 7
        %v889 = vsub.s32 1, %v888
        %v890 = vrot.slane %v478, %v889
        %v891 = vlaneseq
        %v892 = vshrl.u32 %v891, 7
        %v893 = vsub.s32 2, %v892
        %v894 = vrot.slane %v478, %v893
        %v895 = vlaneseq
        %v896 = vshrl.u32 %v895, 7
        %v897 = vsub.s32 3, %v896
        %v898 = vrot.slane %v478, %v897
        %v899 = vlaneseq
        %v900 = vshrl.u32 %v899, 7
        %v901 = vsub.s32 4, %v900
        %v902 = vrot.slane %v478, %v901
        %v903 = vlaneseq
        %v904 = vshrl.u32 %v903, 7
        %v905 = vsub.s32 5, %v904
        %v906 = vrot.slane %v478, %v905
        %v907 = vlaneseq
        %v908 = vshrl.u32 %v907, 7
        %v909 = vsub.s32 6, %v908
        %v910 = vrot.slane %v478, %v909
        %v911 = vlaneseq
        %v912 = vshrl.u32 %v911, 7
        %v913 = vsub.s32 7, %v912
        %v914 = vrot.slane %v478, %v913
        %v915 = vlaneseq
        %v916 = vshrl.u32 %v915, 7
        %v917 = vsub.s32 0, %v916
        %v918 = vrot.slane %v479, %v917
        %v919 = vlaneseq
        %v920 = vshrl.u32 %v919, 7
        %v921 = vsub.s32 1, %v920
        %v922 = vrot.slane %v479, %v921
        %v923 = vlaneseq
        %v924 = vshrl.u32 %v923, 7
        %v925 = vsub.s32 2, %v924
        %v926 = vrot.slane %v479, %v925
        %v927 = vlaneseq
        %v928 = vshrl.u32 %v927, 7
        %v929 = vsub.s32 3, %v928
        %v930 = vrot.slane %v479, %v929
        %v931 = vlaneseq
        %v932 = vshrl.u32 %v931, 7
        %v933 = vsub.s32 4, %v932
        %v934 = vrot.slane %v479, %v933
        %v935 = vlaneseq
        %v936 = vshrl.u32 %v935, 7
        %v937 = vsub.s32 5, %v936
        %v938 = vrot.slane %v479, %v937
        %v939 = vlaneseq
        %v940 = vshrl.u32 %v939, 7
        %v941 = vsub.s32 6, %v940
        %v942 = vrot.slane %v479, %v941
        %v943 = vlaneseq
        %v944 = vshrl.u32 %v943, 7
        %v945 = vsub.s32 7, %v944
        %v946 = vrot.slane %v479, %v945
        %v947 = vlaneseq
        %v948 = vshrl.u32 %v947, 7
        %v949 = vsub.s32 0, %v948
        %v950 = vrot.slane %v480, %v949
        %v951 = vlaneseq
        %v952 = vshrl.u32 %v951, 7
        %v953 = vsub.s32 1, %v952
        %v954 = vrot.slane %v480, %v953
        %v955 = vlaneseq
        %v956 = vshrl.u32 %v955, 7
        %v957 = vsub.s32 2, %v956
        %v958 = vrot.slane %v480, %v957
        %v959 = vlaneseq
        %v960 = vshrl.u32 %v959, 7
        %v961 = vsub.s32 3, %v960
        %v962 = vrot.slane %v480, %v961
        %v963 = vlaneseq
        %v964 = vshrl.u32 %v963, 7
        %v965 = vsub.s32 4, %v964
        %v966 = vrot.slane %v480, %v965
        %v967 = vlaneseq
        %v968 = vshrl.u32 %v967, 7
        %v969 = vsub.s32 5, %v968
        %v970 = vrot.slane %v480, %v969
        %v971 = vlaneseq
        %v972 = vshrl.u32 %v971, 7
        %v973 = vsub.s32 6, %v972
        %v974 = vrot.slane %v480, %v973
        %v975 = vlaneseq
        %v976 = vshrl.u32 %v975, 7
        %v977 = vsub.s32 7, %v976
        %v978 = vrot.slane %v480, %v977
        %v979 = vlaneseq
        %v980 = vshrl.u32 %v979, 7
        %v981 = vsub.s32 0, %v980
        %v982 = vrot.slane %v481, %v981
        %v983 = vlaneseq
        %v984 = vshrl.u32 %v983, 7
        %v985 = vsub.s32 1, %v984
        %v986 = vrot.slane %v481, %v985
        %v987 = vlaneseq
        %v988 = vshrl.u32 %v987, 7
        %v989 = vsub.s32 2, %v988
        %v990 = vrot.slane %v481, %v989
        %v991 = vlaneseq
        %v992 = vshrl.u32 %v991, 7
        %v993 = vsub.s32 3, %v992
        %v994 = vrot.slane %v481, %v993
        %v995 = vlaneseq
        %v996 = vshrl.u32 %v995, 7
        %v997 = vsub.s32 4, %v996
        %v998 = vrot.slane %v481, %v997
        %v999 = vlaneseq
        %v1000 = vshrl.u32 %v999, 7
        %v1001 = vsub.s32 5, %v1000
        %v1002 = vrot.slane %v481, %v1001
        %v1003 = vlaneseq
        %v1004 = vshrl.u32 %v1003, 7
        %v1005 = vsub.s32 6, %v1004
        %v1006 = vrot.slane %v481, %v1005
        %v1007 = vlaneseq
        %v1008 = vshrl.u32 %v1007, 7
        %v1009 = vsub.s32 7, %v1008
        %v1010 = vrot.slane %v481, %v1009
        %v1011 = vlaneseq
        %v1012 = vshrl.u32 %v1011, 7
        %v1013 = vsub.s32 0, %v1012
        %v1014 = vrot.slane %v482, %v1013
        %v1015 = vlaneseq
        %v1016 = vshrl.u32 %v1015, 7
        %v1017 = vsub.s32 1, %v1016
        %v1018 = vrot.slane %v482, %v1017
        %v1019 = vlaneseq
        %v1020 = vshrl.u32 %v1019, 7
        %v1021 = vsub.s32 2, %v1020
        %v1022 = vrot.slane %v482, %v1021
        %v1023 = vlaneseq
        %v1024 = vshrl.u32 %v1023, 7
        %v1025 = vsub.s32 3, %v1024
        %v1026 = vrot.slane %v482, %v1025
        %v1027 = vlaneseq
        %v1028 = vshrl.u32 %v1027, 7
        %v1029 = vsub.s32 4, %v1028
        %v1030 = vrot.slane %v482, %v1029
        %v1031 = vlaneseq
        %v1032 = vshrl.u32 %v1031, 7
        %v1033 = vsub.s32 5, %v1032
        %v1034 = vrot.slane %v482, %v1033
        %v1035 = vlaneseq
        %v1036 = vshrl.u32 %v1035, 7
        %v1037 = vsub.s32 6, %v1036
        %v1038 = vrot.slane %v482, %v1037
        %v1039 = vlaneseq
        %v1040 = vshrl.u32 %v1039, 7
        %v1041 = vsub.s32 7, %v1040
        %v1042 = vrot.slane %v482, %v1041
        %v1043 = vlaneseq
        %v1044 = vshrl.u32 %v1043, 7
        %v1045 = vsub.s32 0, %v1044
        %v1046 = vrot.slane %v483, %v1045
        %v1047 = vlaneseq
        %v1048 = vshrl.u32 %v1047, 7
        %v1049 = vsub.s32 1, %v1048
        %v1050 = vrot.slane %v483, %v1049
        %v1051 = vlaneseq
        %v1052 = vshrl.u32 %v1051, 7
        %v1053 = vsub.s32 2, %v1052
        %v1054 = vrot.slane %v483, %v1053
        %v1055 = vlaneseq
        %v1056 = vshrl.u32 %v1055, 7
        %v1057 = vsub.s32 3, %v1056
        %v1058 = vrot.slane %v483, %v1057
        %v1059 = vlaneseq
        %v1060 = vshrl.u32 %v1059, 7
        %v1061 = vsub.s32 4, %v1060
        %v1062 = vrot.slane %v483, %v1061
        %v1063 = vlaneseq
        %v1064 = vshrl.u32 %v1063, 7
        %v1065 = vsub.s32 5, %v1064
        %v1066 = vrot.slane %v483, %v1065
        %v1067 = vlaneseq
        %v1068 = vshrl.u32 %v1067, 7
        %v1069 = vsub.s32 6, %v1068
        %v1070 = vrot.slane %v483, %v1069
        %v1071 = vlaneseq
        %v1072 = vshrl.u32 %v1071, 7
        %v1073 = vsub.s32 7, %v1072
        %v1074 = vrot.slane %v483, %v1073
        %v1075 = vlaneseq
        %v1076 = vshrl.u32 %v1075, 7
        %v1077 = vsub.s32 0, %v1076
        %v1078 = vrot.slane %v484, %v1077
        %v1079 = vlaneseq
        %v1080 = vshrl.u32 %v1079, 7
        %v1081 = vsub.s32 1, %v1080
        %v1082 = vrot.slane %v484, %v1081
        %v1083 = vlaneseq
        %v1084 = vshrl.u32 %v1083, 7
        %v1085 = vsub.s32 2, %v1084
        %v1086 = vrot.slane %v484, %v1085
        %v1087 = vlaneseq
        %v1088 = vshrl.u32 %v1087, 7
        %v1089 = vsub.s32 3, %v1088
        %v1090 = vrot.slane %v484, %v1089
        %v1091 = vlaneseq
        %v1092 = vshrl.u32 %v1091, 7
        %v1093 = vsub.s32 4, %v1092
        %v1094 = vrot.slane %v484, %v1093
        %v1095 = vlaneseq
        %v1096 = vshrl.u32 %v1095, 7
        %v1097 = vsub.s32 5, %v1096
        %v1098 = vrot.slane %v484, %v1097
        %v1099 = vlaneseq
        %v1100 = vshrl.u32 %v1099, 7
        %v1101 = vsub.s32 6, %v1100
        %v1102 = vrot.slane %v484, %v1101
        %v1103 = vlaneseq
        %v1104 = vshrl.u32 %v1103, 7
        %v1105 = vsub.s32 7, %v1104
        %v1106 = vrot.slane %v484, %v1105
        %v1107 = vlaneseq
        %v1108 = vshrl.u32 %v1107, 7
        %v1109 = vsub.s32 0, %v1108
        %v1110 = vrot.slane %v485, %v1109
        %v1111 = vlaneseq
        %v1112 = vshrl.u32 %v1111, 7
        %v1113 = vsub.s32 1, %v1112
        %v1114 = vrot.slane %v485, %v1113
        %v1115 = vlaneseq
        %v1116 = vshrl.u32 %v1115, 7
        %v1117 = vsub.s32 2, %v1116
        %v1118 = vrot.slane %v485, %v1117
        %v1119 = vlaneseq
        %v1120 = vshrl.u32 %v1119, 7
        %v1121 = vsub.s32 3, %v1120
        %v1122 = vrot.slane %v485, %v1121
        %v1123 = vlaneseq
        %v1124 = vshrl.u32 %v1123, 7
        %v1125 = vsub.s32 4, %v1124
        %v1126 = vrot.slane %v485, %v1125
        %v1127 = vlaneseq
        %v1128 = vshrl.u32 %v1127, 7
        %v1129 = vsub.s32 5, %v1128
        %v1130 = vrot.slane %v485, %v1129
        %v1131 = vlaneseq
        %v1132 = vshrl.u32 %v1131, 7
        %v1133 = vsub.s32 6, %v1132
        %v1134 = vrot.slane %v485, %v1133
        %v1135 = vlaneseq
        %v1136 = vshrl.u32 %v1135, 7
        %v1137 = vsub.s32 7, %v1136
        %v1138 = vrot.slane %v485, %v1137
        %v1139 = vlaneseq
        %v1140 = vshrl.u32 %v1139, 7
        %v1141 = vsub.s32 0, %v1140
        %v1142 = vrot.slane %v486, %v1141
        %v1143 = vlaneseq
        %v1144 = vshrl.u32 %v1143, 7
        %v1145 = vsub.s32 1, %v1144
        %v1146 = vrot.slane %v486, %v1145
        %v1147 = vlaneseq
        %v1148 = vshrl.u32 %v1147, 7
        %v1149 = vsub.s32 2, %v1148
        %v1150 = vrot.slane %v486, %v1149
        %v1151 = vlaneseq
        %v1152 = vshrl.u32 %v1151, 7
        %v1153 = vsub.s32 3, %v1152
        %v1154 = vrot.slane %v486, %v1153
        %v1155 = vlaneseq
        %v1156 = vshrl.u32 %v1155, 7
        %v1157 = vsub.s32 4, %v1156
        %v1158 = vrot.slane %v486, %v1157
        %v1159 = vlaneseq
        %v1160 = vshrl.u32 %v1159, 7
        %v1161 = vsub.s32 5, %v1160
        %v1162 = vrot.slane %v486, %v1161
        %v1163 = vlaneseq
        %v1164 = vshrl.u32 %v1163, 7
        %v1165 = vsub.s32 6, %v1164
        %v1166 = vrot.slane %v486, %v1165
        %v1167 = vlaneseq
        %v1168 = vshrl.u32 %v1167, 7
        %v1169 = vsub.s32 7, %v1168
        %v1170 = vrot.slane %v486, %v1169
        %v1171 = vlaneseq
        %v1172 = vshrl.u32 %v1171, 7
        %v1173 = vsub.s32 0, %v1172
        %v1174 = vrot.slane %v487, %v1173
        %v1175 = vlaneseq
        %v1176 = vshrl.u32 %v1175, 7
        %v1177 = vsub.s32 1, %v1176
        %v1178 = vrot.slane %v487, %v1177
        %v1179 = vlaneseq
        %v1180 = vshrl.u32 %v1179, 7
        %v1181 = vsub.s32 2, %v1180
        %v1182 = vrot.slane %v487, %v1181
        %v1183 = vlaneseq
        %v1184 = vshrl.u32 %v1183, 7
        %v1185 = vsub.s32 3, %v1184
        %v1186 = vrot.slane %v487, %v1185
        %v1187 = vlaneseq
        %v1188 = vshrl.u32 %v1187, 7
        %v1189 = vsub.s32 4, %v1188
        %v1190 = vrot.slane %v487, %v1189
        %v1191 = vlaneseq
        %v1192 = vshrl.u32 %v1191, 7
        %v1193 = vsub.s32 5, %v1192
        %v1194 = vrot.slane %v487, %v1193
        %v1195 = vlaneseq
        %v1196 = vshrl.u32 %v1195, 7
        %v1197 = vsub.s32 6, %v1196
        %v1198 = vrot.slane %v487, %v1197
        %v1199 = vlaneseq
        %v1200 = vshrl.u32 %v1199, 7
        %v1201 = vsub.s32 7, %v1200
        %v1202 = vrot.slane %v487, %v1201
        %v1203 = vlaneseq
        %v1204 = vshrl.u32 %v1203, 7
        %v1205 = vsub.s32 0, %v1204
        %v1206 = vrot.slane %v488, %v1205
        %v1207 = vlaneseq
        %v1208 = vshrl.u32 %v1207, 7
        %v1209 = vsub.s32 1, %v1208
        %v1210 = vrot.slane %v488, %v1209
        %v1211 = vlaneseq
        %v1212 = vshrl.u32 %v1211, 7
        %v1213 = vsub.s32 2, %v1212
        %v1214 = vrot.slane %v488, %v1213
        %v1215 = vlaneseq
        %v1216 = vshrl.u32 %v1215, 7
        %v1217 = vsub.s32 3, %v1216
        %v1218 = vrot.slane %v488, %v1217
        %v1219 = vlaneseq
        %v1220 = vshrl.u32 %v1219, 7
        %v1221 = vsub.s32 4, %v1220
        %v1222 = vrot.slane %v488, %v1221
        %v1223 = vlaneseq
        %v1224 = vshrl.u32 %v1223, 7
        %v1225 = vsub.s32 5, %v1224
        %v1226 = vrot.slane %v488, %v1225
        %v1227 = vlaneseq
        %v1228 = vshrl.u32 %v1227, 7
        %v1229 = vsub.s32 6, %v1228
        %v1230 = vrot.slane %v488, %v1229
        %v1231 = vlaneseq
        %v1232 = vshrl.u32 %v1231, 7
        %v1233 = vsub.s32 7, %v1232
        %v1234 = vrot.slane %v488, %v1233
        %v1235 = vlaneseq
        %v1236 = vshrl.u32 %v1235, 7
        %v1237 = vsub.s32 0, %v1236
        %v1238 = vrot.slane %v489, %v1237
        %v1239 = vlaneseq
        %v1240 = vshrl.u32 %v1239, 7
        %v1241 = vsub.s32 1, %v1240
        %v1242 = vrot.slane %v489, %v1241
        %v1243 = vlaneseq
        %v1244 = vshrl.u32 %v1243, 7
        %v1245 = vsub.s32 2, %v1244
        %v1246 = vrot.slane %v489, %v1245
        %v1247 = vlaneseq
        %v1248 = vshrl.u32 %v1247, 7
        %v1249 = vsub.s32 3, %v1248
        %v1250 = vrot.slane %v489, %v1249
        %v1251 = vlaneseq
        %v1252 = vshrl.u32 %v1251, 7
        %v1253 = vsub.s32 4, %v1252
        %v1254 = vrot.slane %v489, %v1253
        %v1255 = vlaneseq
        %v1256 = vshrl.u32 %v1255, 7
        %v1257 = vsub.s32 5, %v1256
        %v1258 = vrot.slane %v489, %v1257
        %v1259 = vlaneseq
        %v1260 = vshrl.u32 %v1259, 7
        %v1261 = vsub.s32 6, %v1260
        %v1262 = vrot.slane %v489, %v1261
        %v1263 = vlaneseq
        %v1264 = vshrl.u32 %v1263, 7
        %v1265 = vsub.s32 7, %v1264
        %v1266 = vrot.slane %v489, %v1265
        %v1267 = vlaneseq
        %v1268 = vshrl.u32 %v1267, 7
        %v1269 = vsub.s32 0, %v1268
        %v1270 = vrot.slane %v490, %v1269
        %v1271 = vlaneseq
        %v1272 = vshrl.u32 %v1271, 7
        %v1273 = vsub.s32 1, %v1272
        %v1274 = vrot.slane %v490, %v1273
        %v1275 = vlaneseq
        %v1276 = vshrl.u32 %v1275, 7
        %v1277 = vsub.s32 2, %v1276
        %v1278 = vrot.slane %v490, %v1277
        %v1279 = vlaneseq
        %v1280 = vshrl.u32 %v1279, 7
        %v1281 = vsub.s32 3, %v1280
        %v1282 = vrot.slane %v490, %v1281
        %v1283 = vlaneseq
        %v1284 = vshrl.u32 %v1283, 7
        %v1285 = vsub.s32 4, %v1284
        %v1286 = vrot.slane %v490, %v1285
        %v1287 = vlaneseq
        %v1288 = vshrl.u32 %v1287, 7
        %v1289 = vsub.s32 5, %v1288
        %v1290 = vrot.slane %v490, %v1289
        %v1291 = vlaneseq
        %v1292 = vshrl.u32 %v1291, 7
        %v1293 = vsub.s32 6, %v1292
        %v1294 = vrot.slane %v490, %v1293
        %v1295 = vlaneseq
        %v1296 = vshrl.u32 %v1295, 7
        %v1297 = vsub.s32 7, %v1296
        %v1298 = vrot.slane %v490, %v1297
        %v1299 = vlaneseq
        %v1300 = vshrl.u32 %v1299, 7
        %v1301 = vsub.s32 0, %v1300
        %v1302 = vrot.slane %v491, %v1301
        %v1303 = vlaneseq
        %v1304 = vshrl.u32 %v1303, 7
        %v1305 = vsub.s32 1, %v1304
        %v1306 = vrot.slane %v491, %v1305
        %v1307 = vlaneseq
        %v1308 = vshrl.u32 %v1307, 7
        %v1309 = vsub.s32 2, %v1308
        %v1310 = vrot.slane %v491, %v1309
        %v1311 = vlaneseq
        %v1312 = vshrl.u32 %v1311, 7
        %v1313 = vsub.s32 3, %v1312
        %v1314 = vrot.slane %v491, %v1313
        %v1315 = vlaneseq
        %v1316 = vshrl.u32 %v1315, 7
        %v1317 = vsub.s32 4, %v1316
        %v1318 = vrot.slane %v491, %v1317
        %v1319 = vlaneseq
        %v1320 = vshrl.u32 %v1319, 7
        %v1321 = vsub.s32 5, %v1320
        %v1322 = vrot.slane %v491, %v1321
        %v1323 = vlaneseq
        %v1324 = vshrl.u32 %v1323, 7
        %v1325 = vsub.s32 6, %v1324
        %v1326 = vrot.slane %v491, %v1325
        %v1327 = vlaneseq
        %v1328 = vshrl.u32 %v1327, 7
        %v1329 = vsub.s32 7, %v1328
        %v1330 = vrot.slane %v491, %v1329
        %v1331 = vlaneseq
        %v1332 = vshrl.u32 %v1331, 7
        %v1333 = vsub.s32 0, %v1332
        %v1334 = vrot.slane %v492, %v1333
        %v1335 = vlaneseq
        %v1336 = vshrl.u32 %v1335, 7
        %v1337 = vsub.s32 1, %v1336
        %v1338 = vrot.slane %v492, %v1337
        %v1339 = vlaneseq
        %v1340 = vshrl.u32 %v1339, 7
        %v1341 = vsub.s32 2, %v1340
        %v1342 = vrot.slane %v492, %v1341
        %v1343 = vlaneseq
        %v1344 = vshrl.u32 %v1343, 7
        %v1345 = vsub.s32 3, %v1344
        %v1346 = vrot.slane %v492, %v1345
        %v1347 = vlaneseq
        %v1348 = vshrl.u32 %v1347, 7
        %v1349 = vsub.s32 4, %v1348
        %v1350 = vrot.slane %v492, %v1349
        %v1351 = vlaneseq
        %v1352 = vshrl.u32 %v1351, 7
        %v1353 = vsub.s32 5, %v1352
        %v1354 = vrot.slane %v492, %v1353
        %v1355 = vlaneseq
        %v1356 = vshrl.u32 %v1355, 7
        %v1357 = vsub.s32 6, %v1356
        %v1358 = vrot.slane %v492, %v1357
        %v1359 = vlaneseq
        %v1360 = vshrl.u32 %v1359, 7
        %v1361 = vsub.s32 7, %v1360
        %v1362 = vrot.slane %v492, %v1361
        %v1363 = vlaneseq
        %v1364 = vshrl.u32 %v1363, 7
        %v1365 = vsub.s32 0, %v1364
        %v1366 = vrot.slane %v493, %v1365
        %v1367 = vlaneseq
        %v1368 = vshrl.u32 %v1367, 7
        %v1369 = vsub.s32 1, %v1368
        %v1370 = vrot.slane %v493, %v1369
        %v1371 = vlaneseq
        %v1372 = vshrl.u32 %v1371, 7
        %v1373 = vsub.s32 2, %v1372
        %v1374 = vrot.slane %v493, %v1373
        %v1375 = vlaneseq
        %v1376 = vshrl.u32 %v1375, 7
        %v1377 = vsub.s32 3, %v1376
        %v1378 = vrot.slane %v493, %v1377
        %v1379 = vlaneseq
        %v1380 = vshrl.u32 %v1379, 7
        %v1381 = vsub.s32 4, %v1380
        %v1382 = vrot.slane %v493, %v1381
        %v1383 = vlaneseq
        %v1384 = vshrl.u32 %v1383, 7
        %v1385 = vsub.s32 5, %v1384
        %v1386 = vrot.slane %v493, %v1385
        %v1387 = vlaneseq
        %v1388 = vshrl.u32 %v1387, 7
        %v1389 = vsub.s32 6, %v1388
        %v1390 = vrot.slane %v493, %v1389
        %v1391 = vlaneseq
        %v1392 = vshrl.u32 %v1391, 7
        %v1393 = vsub.s32 7, %v1392
        %v1394 = vrot.slane %v493, %v1393
        %v1395 = vlaneseq
        %v1396 = vshrl.u32 %v1395, 7
        %v1397 = vsub.s32 0, %v1396
        %v1398 = vrot.slane %v494, %v1397
        %v1399 = vlaneseq
        %v1400 = vshrl.u32 %v1399, 7
        %v1401 = vsub.s32 1, %v1400
        %v1402 = vrot.slane %v494, %v1401
        %v1403 = vlaneseq
        %v1404 = vshrl.u32 %v1403, 7
        %v1405 = vsub.s32 2, %v1404
        %v1406 = vrot.slane %v494, %v1405
        %v1407 = vlaneseq
        %v1408 = vshrl.u32 %v1407, 7
        %v1409 = vsub.s32 3, %v1408
        %v1410 = vrot.slane %v494, %v1409
        %v1411 = vlaneseq
        %v1412 = vshrl.u32 %v1411, 7
        %v1413 = vsub.s32 4, %v1412
        %v1414 = vrot.slane %v494, %v1413
        %v1415 = vlaneseq
        %v1416 = vshrl.u32 %v1415, 7
        %v1417 = vsub.s32 5, %v1416
        %v1418 = vrot.slane %v494, %v1417
        %v1419 = vlaneseq
        %v1420 = vshrl.u32 %v1419, 7
        %v1421 = vsub.s32 6, %v1420
        %v1422 = vrot.slane %v494, %v1421
        %v1423 = vlaneseq
        %v1424 = vshrl.u32 %v1423, 7
        %v1425 = vsub.s32 7, %v1424
        %v1426 = vrot.slane %v494, %v1425
        %v1427 = vlaneseq
        %v1428 = vshrl.u32 %v1427, 7
        %v1429 = vsub.s32 0, %v1428
        %v1430 = vrot.slane %v495, %v1429
        %v1431 = vlaneseq
        %v1432 = vshrl.u32 %v1431, 7
        %v1433 = vsub.s32 1, %v1432
        %v1434 = vrot.slane %v495, %v1433
        %v1435 = vlaneseq
        %v1436 = vshrl.u32 %v1435, 7
        %v1437 = vsub.s32 2, %v1436
        %v1438 = vrot.slane %v495, %v1437
        %v1439 = vlaneseq
        %v1440 = vshrl.u32 %v1439, 7
        %v1441 = vsub.s32 3, %v1440
        %v1442 = vrot.slane %v495, %v1441
        %v1443 = vlaneseq
        %v1444 = vshrl.u32 %v1443, 7
        %v1445 = vsub.s32 4, %v1444
        %v1446 = vrot.slane %v495, %v1445
        %v1447 = vlaneseq
        %v1448 = vshrl.u32 %v1447, 7
        %v1449 = vsub.s32 5, %v1448
        %v1450 = vrot.slane %v495, %v1449
        %v1451 = vlaneseq
        %v1452 = vshrl.u32 %v1451, 7
        %v1453 = vsub.s32 6, %v1452
        %v1454 = vrot.slane %v495, %v1453
        %v1455 = vlaneseq
        %v1456 = vshrl.u32 %v1455, 7
        %v1457 = vsub.s32 7, %v1456
        %v1458 = vrot.slane %v495, %v1457
        %v1459 = vlaneseq
        %v1460 = vshrl.u32 %v1459, 7
        %v1461 = vsub.s32 0, %v1460
        %v1462 = vrot.slane %v496, %v1461
        %v1463 = vlaneseq
        %v1464 = vshrl.u32 %v1463, 7
        %v1465 = vsub.s32 1, %v1464
        %v1466 = vrot.slane %v496, %v1465
        %v1467 = vlaneseq
        %v1468 = vshrl.u32 %v1467, 7
        %v1469 = vsub.s32 2, %v1468
        %v1470 = vrot.slane %v496, %v1469
        %v1471 = vlaneseq
        %v1472 = vshrl.u32 %v1471, 7
        %v1473 = vsub.s32 3, %v1472
        %v1474 = vrot.slane %v496, %v1473
        %v1475 = vlaneseq
        %v1476 = vshrl.u32 %v1475, 7
        %v1477 = vsub.s32 4, %v1476
        %v1478 = vrot.slane %v496, %v1477
        %v1479 = vlaneseq
        %v1480 = vshrl.u32 %v1479, 7
        %v1481 = vsub.s32 5, %v1480
        %v1482 = vrot.slane %v496, %v1481
        %v1483 = vlaneseq
        %v1484 = vshrl.u32 %v1483, 7
        %v1485 = vsub.s32 6, %v1484
        %v1486 = vrot.slane %v496, %v1485
        %v1487 = vlaneseq
        %v1488 = vshrl.u32 %v1487, 7
        %v1489 = vsub.s32 7, %v1488
        %v1490 = vrot.slane %v496, %v1489
        %v1491 = vlaneseq
        %v1492 = vshrl.u32 %v1491, 7
        %v1493 = vsub.s32 0, %v1492
        %v1494 = vrot.slane %v497, %v1493
        %v1495 = vlaneseq
        %v1496 = vshrl.u32 %v1495, 7
        %v1497 = vsub.s32 1, %v1496
        %v1498 = vrot.slane %v497, %v1497
        %v1499 = vlaneseq
        %v1500 = vshrl.u32 %v1499, 7
        %v1501 = vsub.s32 2, %v1500
        %v1502 = vrot.slane %v497, %v1501
        %v1503 = vlaneseq
        %v1504 = vshrl.u32 %v1503, 7
        %v1505 = vsub.s32 3, %v1504
        %v1506 = vrot.slane %v497, %v1505
        %v1507 = vlaneseq
        %v1508 = vshrl.u32 %v1507, 7
        %v1509 = vsub.s32 4, %v1508
        %v1510 = vrot.slane %v497, %v1509
        %v1511 = vlaneseq
        %v1512 = vshrl.u32 %v1511, 7
        %v1513 = vsub.s32 5, %v1512
        %v1514 = vrot.slane %v497, %v1513
        %v1515 = vlaneseq
        %v1516 = vshrl.u32 %v1515, 7
        %v1517 = vsub.s32 6, %v1516
        %v1518 = vrot.slane %v497, %v1517
        %v1519 = vlaneseq
        %v1520 = vshrl.u32 %v1519, 7
        %v1521 = vsub.s32 7, %v1520
        %v1522 = vrot.slane %v497, %v1521
        %v1523 = vlaneseq
        %v1524 = vshrl.u32 %v1523, 7
        %v1525 = vsub.s32 0, %v1524
        %v1526 = vrot.slane %v498, %v1525
        %v1527 = vlaneseq
        %v1528 = vshrl.u32 %v1527, 7
        %v1529 = vsub.s32 1, %v1528
        %v1530 = vrot.slane %v498, %v1529
        %v1531 = vlaneseq
        %v1532 = vshrl.u32 %v1531, 7
        %v1533 = vsub.s32 2, %v1532
        %v1534 = vrot.slane %v498, %v1533
        %v1535 = vlaneseq
        %v1536 = vshrl.u32 %v1535, 7
        %v1537 = vsub.s32 3, %v1536
        %v1538 = vrot.slane %v498, %v1537
        %v1539 = vlaneseq
        %v1540 = vshrl.u32 %v1539, 7
        %v1541 = vsub.s32 4, %v1540
        %v1542 = vrot.slane %v498, %v1541
        %v1543 = vlaneseq
        %v1544 = vshrl.u32 %v1543, 7
        %v1545 = vsub.s32 5, %v1544
        %v1546 = vrot.slane %v498, %v1545
        %v1547 = vlaneseq
        %v1548 = vshrl.u32 %v1547, 7
        %v1549 = vsub.s32 6, %v1548
        %v1550 = vrot.slane %v498, %v1549
        %v1551 = vlaneseq
        %v1552 = vshrl.u32 %v1551, 7
        %v1553 = vsub.s32 7, %v1552
        %v1554 = vrot.slane %v498, %v1553
        %v1555 = vcombine.low %v534, %v538
        %v1556 = vcombine.low %v542, %v546
        %v1557 = vcombine.low %v550, %v554
        %v1558 = vcombine.low %v558, %v562
        %v1560 = vunpack.c.l.s4 1966171168
        %v1561 = vunpack.c.0.s8 %v1560
        %v1562 = vlaneseq
        %v1563 = vshrl.u32 %v1562, 7
        %v1564 = vsub.s32 %v1561, %v1563
        %v1565 = vrot.slane %v1555, %v1564
        %v1567 = vunpack.c.l.s4 1966171168
        %v1568 = vunpack.c.0.s8 %v1567
        %v1569 = vlaneseq
        %v1570 = vshrl.u32 %v1569, 7
        %v1571 = vsub.s32 %v1568, %v1570
        %v1572 = vrot.slane %v1556, %v1571
        %v1574 = vunpack.c.l.s4 1966171168
        %v1575 = vunpack.c.0.s8 %v1574
        %v1576 = vlaneseq
        %v1577 = vshrl.u32 %v1576, 7
        %v1578 = vsub.s32 %v1575, %v1577
        %v1579 = vrot.slane %v1557, %v1578
        %v1581 = vunpack.c.l.s4 1966171168
        %v1582 = vunpack.c.0.s8 %v1581
        %v1583 = vlaneseq
        %v1584 = vshrl.u32 %v1583, 7
        %v1585 = vsub.s32 %v1582, %v1584
        %v1586 = vrot.slane %v1558, %v1585
        %v1587 = vcombine.low %v1565, %v1572
        %v1588 = vcombine.low %v1579, %v1586
        %v1590 = vunpack.c.l.s4 1966171168
        %v1591 = vunpack.c.0.s8 %v1590
        %v1592 = vlaneseq
        %v1593 = vshrl.u32 %v1592, 7
        %v1594 = vsub.s32 %v1591, %v1593
        %v1595 = vrot.slane %v1587, %v1594
        %v1597 = vunpack.c.l.s4 1966171168
        %v1598 = vunpack.c.0.s8 %v1597
        %v1599 = vlaneseq
        %v1600 = vshrl.u32 %v1599, 7
        %v1601 = vsub.s32 %v1598, %v1600
        %v1602 = vrot.slane %v1588, %v1601
        %v1603 = vcombine.low %v1595, %v1602
        %v1604 = vcombine.low %v566, %v570
        %v1605 = vcombine.low %v574, %v578
        %v1606 = vcombine.low %v582, %v586
        %v1607 = vcombine.low %v590, %v594
        %v1609 = vunpack.c.l.s4 1966171168
        %v1610 = vunpack.c.0.s8 %v1609
        %v1611 = vlaneseq
        %v1612 = vshrl.u32 %v1611, 7
        %v1613 = vsub.s32 %v1610, %v1612
        %v1614 = vrot.slane %v1604, %v1613
        %v1616 = vunpack.c.l.s4 1966171168
        %v1617 = vunpack.c.0.s8 %v1616
        %v1618 = vlaneseq
        %v1619 = vshrl.u32 %v1618, 7
        %v1620 = vsub.s32 %v1617, %v1619
        %v1621 = vrot.slane %v1605, %v1620
        %v1623 = vunpack.c.l.s4 1966171168
        %v1624 = vunpack.c.0.s8 %v1623
        %v1625 = vlaneseq
        %v1626 = vshrl.u32 %v1625, 7
        %v1627 = vsub.s32 %v1624, %v1626
        %v1628 = vrot.slane %v1606, %v1627
        %v1630 = vunpack.c.l.s4 1966171168
        %v1631 = vunpack.c.0.s8 %v1630
        %v1632 = vlaneseq
        %v1633 = vshrl.u32 %v1632, 7
        %v1634 = vsub.s32 %v1631, %v1633
        %v1635 = vrot.slane %v1607, %v1634
        %v1636 = vcombine.low %v1614, %v1621
        %v1637 = vcombine.low %v1628, %v1635
        %v1639 = vunpack.c.l.s4 1966171168
        %v1640 = vunpack.c.0.s8 %v1639
        %v1641 = vlaneseq
        %v1642 = vshrl.u32 %v1641, 7
        %v1643 = vsub.s32 %v1640, %v1642
        %v1644 = vrot.slane %v1636, %v1643
        %v1646 = vunpack.c.l.s4 1966171168
        %v1647 = vunpack.c.0.s8 %v1646
        %v1648 = vlaneseq
        %v1649 = vshrl.u32 %v1648, 7
        %v1650 = vsub.s32 %v1647, %v1649
        %v1651 = vrot.slane %v1637, %v1650
        %v1652 = vcombine.low %v1644, %v1651
        %v1653 = vcombine.low %v598, %v602
        %v1654 = vcombine.low %v606, %v610
        %v1655 = vcombine.low %v614, %v618
        %v1656 = vcombine.low %v622, %v626
        %v1658 = vunpack.c.l.s4 1966171168
        %v1659 = vunpack.c.0.s8 %v1658
        %v1660 = vlaneseq
        %v1661 = vshrl.u32 %v1660, 7
        %v1662 = vsub.s32 %v1659, %v1661
        %v1663 = vrot.slane %v1653, %v1662
        %v1665 = vunpack.c.l.s4 1966171168
        %v1666 = vunpack.c.0.s8 %v1665
        %v1667 = vlaneseq
        %v1668 = vshrl.u32 %v1667, 7
        %v1669 = vsub.s32 %v1666, %v1668
        %v1670 = vrot.slane %v1654, %v1669
        %v1672 = vunpack.c.l.s4 1966171168
        %v1673 = vunpack.c.0.s8 %v1672
        %v1674 = vlaneseq
        %v1675 = vshrl.u32 %v1674, 7
        %v1676 = vsub.s32 %v1673, %v1675
        %v1677 = vrot.slane %v1655, %v1676
        %v1679 = vunpack.c.l.s4 1966171168
        %v1680 = vunpack.c.0.s8 %v1679
        %v1681 = vlaneseq
        %v1682 = vshrl.u32 %v1681, 7
        %v1683 = vsub.s32 %v1680, %v1682
        %v1684 = vrot.slane %v1656, %v1683
        %v1685 = vcombine.low %v1663, %v1670
        %v1686 = vcombine.low %v1677, %v1684
        %v1688 = vunpack.c.l.s4 1966171168
        %v1689 = vunpack.c.0.s8 %v1688
        %v1690 = vlaneseq
        %v1691 = vshrl.u32 %v1690, 7
        %v1692 = vsub.s32 %v1689, %v1691
        %v1693 = vrot.slane %v1685, %v1692
        %v1695 = vunpack.c.l.s4 1966171168
        %v1696 = vunpack.c.0.s8 %v1695
        %v1697 = vlaneseq
        %v1698 = vshrl.u32 %v1697, 7
        %v1699 = vsub.s32 %v1696, %v1698
        %v1700 = vrot.slane %v1686, %v1699
        %v1701 = vcombine.low %v1693, %v1700
        %v1702 = vcombine.low %v630, %v634
        %v1703 = vcombine.low %v638, %v642
        %v1704 = vcombine.low %v646, %v650
        %v1705 = vcombine.low %v654, %v658
        %v1707 = vunpack.c.l.s4 1966171168
        %v1708 = vunpack.c.0.s8 %v1707
        %v1709 = vlaneseq
        %v1710 = vshrl.u32 %v1709, 7
        %v1711 = vsub.s32 %v1708, %v1710
        %v1712 = vrot.slane %v1702, %v1711
        %v1714 = vunpack.c.l.s4 1966171168
        %v1715 = vunpack.c.0.s8 %v1714
        %v1716 = vlaneseq
        %v1717 = vshrl.u32 %v1716, 7
        %v1718 = vsub.s32 %v1715, %v1717
        %v1719 = vrot.slane %v1703, %v1718
        %v1721 = vunpack.c.l.s4 1966171168
        %v1722 = vunpack.c.0.s8 %v1721
        %v1723 = vlaneseq
        %v1724 = vshrl.u32 %v1723, 7
        %v1725 = vsub.s32 %v1722, %v1724
        %v1726 = vrot.slane %v1704, %v1725
        %v1728 = vunpack.c.l.s4 1966171168
        %v1729 = vunpack.c.0.s8 %v1728
        %v1730 = vlaneseq
        %v1731 = vshrl.u32 %v1730, 7
        %v1732 = vsub.s32 %v1729, %v1731
        %v1733 = vrot.slane %v1705, %v1732
        %v1734 = vcombine.low %v1712, %v1719
        %v1735 = vcombine.low %v1726, %v1733
        %v1737 = vunpack.c.l.s4 1966171168
        %v1738 = vunpack.c.0.s8 %v1737
        %v1739 = vlaneseq
        %v1740 = vshrl.u32 %v1739, 7
        %v1741 = vsub.s32 %v1738, %v1740
        %v1742 = vrot.slane %v1734, %v1741
        %v1744 = vunpack.c.l.s4 1966171168
        %v1745 = vunpack.c.0.s8 %v1744
        %v1746 = vlaneseq
        %v1747 = vshrl.u32 %v1746, 7
        %v1748 = vsub.s32 %v1745, %v1747
        %v1749 = vrot.slane %v1735, %v1748
        %v1750 = vcombine.low %v1742, %v1749
        %v1751 = vcombine.low %v662, %v666
        %v1752 = vcombine.low %v670, %v674
        %v1753 = vcombine.low %v678, %v682
        %v1754 = vcombine.low %v686, %v690
        %v1756 = vunpack.c.l.s4 1966171168
        %v1757 = vunpack.c.0.s8 %v1756
        %v1758 = vlaneseq
        %v1759 = vshrl.u32 %v1758, 7
        %v1760 = vsub.s32 %v1757, %v1759
        %v1761 = vrot.slane %v1751, %v1760
        %v1763 = vunpack.c.l.s4 1966171168
        %v1764 = vunpack.c.0.s8 %v1763
        %v1765 = vlaneseq
        %v1766 = vshrl.u32 %v1765, 7
        %v1767 = vsub.s32 %v1764, %v1766
        %v1768 = vrot.slane %v1752, %v1767
        %v1770 = vunpack.c.l.s4 1966171168
        %v1771 = vunpack.c.0.s8 %v1770
        %v1772 = vlaneseq
        %v1773 = vshrl.u32 %v1772, 7
        %v1774 = vsub.s32 %v1771, %v1773
        %v1775 = vrot.slane %v1753, %v1774
        %v1777 = vunpack.c.l.s4 1966171168
        %v1778 = vunpack.c.0.s8 %v1777
        %v1779 = vlaneseq
        %v1780 = vshrl.u32 %v1779, 7
        %v1781 = vsub.s32 %v1778, %v1780
        %v1782 = vrot.slane %v1754, %v1781
        %v1783 = vcombine.low %v1761, %v1768
        %v1784 = vcombine.low %v1775, %v1782
        %v1786 = vunpack.c.l.s4 1966171168
        %v1787 = vunpack.c.0.s8 %v1786
        %v1788 = vlaneseq
        %v1789 = vshrl.u32 %v1788, 7
        %v1790 = vsub.s32 %v1787, %v1789
        %v1791 = vrot.slane %v1783, %v1790
        %v1793 = vunpack.c.l.s4 1966171168
        %v1794 = vunpack.c.0.s8 %v1793
        %v1795 = vlaneseq
        %v1796 = vshrl.u32 %v1795, 7
        %v1797 = vsub.s32 %v1794, %v1796
        %v1798 = vrot.slane %v1784, %v1797
        %v1799 = vcombine.low %v1791, %v1798
        %v1800 = vcombine.low %v694, %v698
        %v1801 = vcombine.low %v702, %v706
        %v1802 = vcombine.low %v710, %v714
        %v1803 = vcombine.low %v718, %v722
        %v1805 = vunpack.c.l.s4 1966171168
        %v1806 = vunpack.c.0.s8 %v1805
        %v1807 = vlaneseq
        %v1808 = vshrl.u32 %v1807, 7
        %v1809 = vsub.s32 %v1806, %v1808
        %v1810 = vrot.slane %v1800, %v1809
        %v1812 = vunpack.c.l.s4 1966171168
        %v1813 = vunpack.c.0.s8 %v1812
        %v1814 = vlaneseq
        %v1815 = vshrl.u32 %v1814, 7
        %v1816 = vsub.s32 %v1813, %v1815
        %v1817 = vrot.slane %v1801, %v1816
        %v1819 = vunpack.c.l.s4 1966171168
        %v1820 = vunpack.c.0.s8 %v1819
        %v1821 = vlaneseq
        %v1822 = vshrl.u32 %v1821, 7
        %v1823 = vsub.s32 %v1820, %v1822
        %v1824 = vrot.slane %v1802, %v1823
        %v1826 = vunpack.c.l.s4 1966171168
        %v1827 = vunpack.c.0.s8 %v1826
        %v1828 = vlaneseq
        %v1829 = vshrl.u32 %v1828, 7
        %v1830 = vsub.s32 %v1827, %v1829
        %v1831 = vrot.slane %v1803, %v1830
        %v1832 = vcombine.low %v1810, %v1817
        %v1833 = vcombine.low %v1824, %v1831
        %v1835 = vunpack.c.l.s4 1966171168
        %v1836 = vunpack.c.0.s8 %v1835
        %v1837 = vlaneseq
        %v1838 = vshrl.u32 %v1837, 7
        %v1839 = vsub.s32 %v1836, %v1838
        %v1840 = vrot.slane %v1832, %v1839
        %v1842 = vunpack.c.l.s4 1966171168
        %v1843 = vunpack.c.0.s8 %v1842
        %v1844 = vlaneseq
        %v1845 = vshrl.u32 %v1844, 7
        %v1846 = vsub.s32 %v1843, %v1845
        %v1847 = vrot.slane %v1833, %v1846
        %v1848 = vcombine.low %v1840, %v1847
        %v1849 = vcombine.low %v726, %v730
        %v1850 = vcombine.low %v734, %v738
        %v1851 = vcombine.low %v742, %v746
        %v1852 = vcombine.low %v750, %v754
        %v1854 = vunpack.c.l.s4 1966171168
        %v1855 = vunpack.c.0.s8 %v1854
        %v1856 = vlaneseq
        %v1857 = vshrl.u32 %v1856, 7
        %v1858 = vsub.s32 %v1855, %v1857
        %v1859 = vrot.slane %v1849, %v1858
        %v1861 = vunpack.c.l.s4 1966171168
        %v1862 = vunpack.c.0.s8 %v1861
        %v1863 = vlaneseq
        %v1864 = vshrl.u32 %v1863, 7
        %v1865 = vsub.s32 %v1862, %v1864
        %v1866 = vrot.slane %v1850, %v1865
        %v1868 = vunpack.c.l.s4 1966171168
        %v1869 = vunpack.c.0.s8 %v1868
        %v1870 = vlaneseq
        %v1871 = vshrl.u32 %v1870, 7
        %v1872 = vsub.s32 %v1869, %v1871
        %v1873 = vrot.slane %v1851, %v1872
        %v1875 = vunpack.c.l.s4 1966171168
        %v1876 = vunpack.c.0.s8 %v1875
        %v1877 = vlaneseq
        %v1878 = vshrl.u32 %v1877, 7
        %v1879 = vsub.s32 %v1876, %v1878
        %v1880 = vrot.slane %v1852, %v1879
        %v1881 = vcombine.low %v1859, %v1866
        %v1882 = vcombine.low %v1873, %v1880
        %v1884 = vunpack.c.l.s4 1966171168
        %v1885 = vunpack.c.0.s8 %v1884
        %v1886 = vlaneseq
        %v1887 = vshrl.u32 %v1886, 7
        %v1888 = vsub.s32 %v1885, %v1887
        %v1889 = vrot.slane %v1881, %v1888
        %v1891 = vunpack.c.l.s4 1966171168
        %v1892 = vunpack.c.0.s8 %v1891
        %v1893 = vlaneseq
        %v1894 = vshrl.u32 %v1893, 7
        %v1895 = vsub.s32 %v1892, %v1894
        %v1896 = vrot.slane %v1882, %v1895
        %v1897 = vcombine.low %v1889, %v1896
        %v1898 = vcombine.low %v758, %v762
        %v1899 = vcombine.low %v766, %v770
        %v1900 = vcombine.low %v774, %v778
        %v1901 = vcombine.low %v782, %v786
        %v1903 = vunpack.c.l.s4 1966171168
        %v1904 = vunpack.c.0.s8 %v1903
        %v1905 = vlaneseq
        %v1906 = vshrl.u32 %v1905, 7
        %v1907 = vsub.s32 %v1904, %v1906
        %v1908 = vrot.slane %v1898, %v1907
        %v1910 = vunpack.c.l.s4 1966171168
        %v1911 = vunpack.c.0.s8 %v1910
        %v1912 = vlaneseq
        %v1913 = vshrl.u32 %v1912, 7
        %v1914 = vsub.s32 %v1911, %v1913
        %v1915 = vrot.slane %v1899, %v1914
        %v1917 = vunpack.c.l.s4 1966171168
        %v1918 = vunpack.c.0.s8 %v1917
        %v1919 = vlaneseq
        %v1920 = vshrl.u32 %v1919, 7
        %v1921 = vsub.s32 %v1918, %v1920
        %v1922 = vrot.slane %v1900, %v1921
        %v1924 = vunpack.c.l.s4 1966171168
        %v1925 = vunpack.c.0.s8 %v1924
        %v1926 = vlaneseq
        %v1927 = vshrl.u32 %v1926, 7
        %v1928 = vsub.s32 %v1925, %v1927
        %v1929 = vrot.slane %v1901, %v1928
        %v1930 = vcombine.low %v1908, %v1915
        %v1931 = vcombine.low %v1922, %v1929
        %v1933 = vunpack.c.l.s4 1966171168
        %v1934 = vunpack.c.0.s8 %v1933
        %v1935 = vlaneseq
        %v1936 = vshrl.u32 %v1935, 7
        %v1937 = vsub.s32 %v1934, %v1936
        %v1938 = vrot.slane %v1930, %v1937
        %v1940 = vunpack.c.l.s4 1966171168
        %v1941 = vunpack.c.0.s8 %v1940
        %v1942 = vlaneseq
        %v1943 = vshrl.u32 %v1942, 7
        %v1944 = vsub.s32 %v1941, %v1943
        %v1945 = vrot.slane %v1931, %v1944
        %v1946 = vcombine.low %v1938, %v1945
        %v1947 = vcombine.low %v790, %v794
        %v1948 = vcombine.low %v798, %v802
        %v1949 = vcombine.low %v806, %v810
        %v1950 = vcombine.low %v814, %v818
        %v1952 = vunpack.c.l.s4 1966171168
        %v1953 = vunpack.c.0.s8 %v1952
        %v1954 = vlaneseq
        %v1955 = vshrl.u32 %v1954, 7
        %v1956 = vsub.s32 %v1953, %v1955
        %v1957 = vrot.slane %v1947, %v1956
        %v1959 = vunpack.c.l.s4 1966171168
        %v1960 = vunpack.c.0.s8 %v1959
        %v1961 = vlaneseq
        %v1962 = vshrl.u32 %v1961, 7
        %v1963 = vsub.s32 %v1960, %v1962
        %v1964 = vrot.slane %v1948, %v1963
        %v1966 = vunpack.c.l.s4 1966171168
        %v1967 = vunpack.c.0.s8 %v1966
        %v1968 = vlaneseq
        %v1969 = vshrl.u32 %v1968, 7
        %v1970 = vsub.s32 %v1967, %v1969
        %v1971 = vrot.slane %v1949, %v1970
        %v1973 = vunpack.c.l.s4 1966171168
        %v1974 = vunpack.c.0.s8 %v1973
        %v1975 = vlaneseq
        %v1976 = vshrl.u32 %v1975, 7
        %v1977 = vsub.s32 %v1974, %v1976
        %v1978 = vrot.slane %v1950, %v1977
        %v1979 = vcombine.low %v1957, %v1964
        %v1980 = vcombine.low %v1971, %v1978
        %v1982 = vunpack.c.l.s4 1966171168
        %v1983 = vunpack.c.0.s8 %v1982
        %v1984 = vlaneseq
        %v1985 = vshrl.u32 %v1984, 7
        %v1986 = vsub.s32 %v1983, %v1985
        %v1987 = vrot.slane %v1979, %v1986
        %v1989 = vunpack.c.l.s4 1966171168
        %v1990 = vunpack.c.0.s8 %v1989
        %v1991 = vlaneseq
        %v1992 = vshrl.u32 %v1991, 7
        %v1993 = vsub.s32 %v1990, %v1992
        %v1994 = vrot.slane %v1980, %v1993
        %v1995 = vcombine.low %v1987, %v1994
        %v1996 = vcombine.low %v822, %v826
        %v1997 = vcombine.low %v830, %v834
        %v1998 = vcombine.low %v838, %v842
        %v1999 = vcombine.low %v846, %v850
        %v2001 = vunpack.c.l.s4 1966171168
        %v2002 = vunpack.c.0.s8 %v2001
        %v2003 = vlaneseq
        %v2004 = vshrl.u32 %v2003, 7
        %v2005 = vsub.s32 %v2002, %v2004
        %v2006 = vrot.slane %v1996, %v2005
        %v2008 = vunpack.c.l.s4 1966171168
        %v2009 = vunpack.c.0.s8 %v2008
        %v2010 = vlaneseq
        %v2011 = vshrl.u32 %v2010, 7
        %v2012 = vsub.s32 %v2009, %v2011
        %v2013 = vrot.slane %v1997, %v2012
        %v2015 = vunpack.c.l.s4 1966171168
        %v2016 = vunpack.c.0.s8 %v2015
        %v2017 = vlaneseq
        %v2018 = vshrl.u32 %v2017, 7
        %v2019 = vsub.s32 %v2016, %v2018
        %v2020 = vrot.slane %v1998, %v2019
        %v2022 = vunpack.c.l.s4 1966171168
        %v2023 = vunpack.c.0.s8 %v2022
        %v2024 = vlaneseq
        %v2025 = vshrl.u32 %v2024, 7
        %v2026 = vsub.s32 %v2023, %v2025
        %v2027 = vrot.slane %v1999, %v2026
        %v2028 = vcombine.low %v2006, %v2013
        %v2029 = vcombine.low %v2020, %v2027
        %v2031 = vunpack.c.l.s4 1966171168
        %v2032 = vunpack.c.0.s8 %v2031
        %v2033 = vlaneseq
        %v2034 = vshrl.u32 %v2033, 7
        %v2035 = vsub.s32 %v2032, %v2034
        %v2036 = vrot.slane %v2028, %v2035
        %v2038 = vunpack.c.l.s4 1966171168
        %v2039 = vunpack.c.0.s8 %v2038
        %v2040 = vlaneseq
        %v2041 = vshrl.u32 %v2040, 7
        %v2042 = vsub.s32 %v2039, %v2041
        %v2043 = vrot.slane %v2029, %v2042
        %v2044 = vcombine.low %v2036, %v2043
        %v2045 = vcombine.low %v854, %v858
        %v2046 = vcombine.low %v862, %v866
        %v2047 = vcombine.low %v870, %v874
        %v2048 = vcombine.low %v878, %v882
        %v2050 = vunpack.c.l.s4 1966171168
        %v2051 = vunpack.c.0.s8 %v2050
        %v2052 = vlaneseq
        %v2053 = vshrl.u32 %v2052, 7
        %v2054 = vsub.s32 %v2051, %v2053
        %v2055 = vrot.slane %v2045, %v2054
        %v2057 = vunpack.c.l.s4 1966171168
        %v2058 = vunpack.c.0.s8 %v2057
        %v2059 = vlaneseq
        %v2060 = vshrl.u32 %v2059, 7
        %v2061 = vsub.s32 %v2058, %v2060
        %v2062 = vrot.slane %v2046, %v2061
        %v2064 = vunpack.c.l.s4 1966171168
        %v2065 = vunpack.c.0.s8 %v2064
        %v2066 = vlaneseq
        %v2067 = vshrl.u32 %v2066, 7
        %v2068 = vsub.s32 %v2065, %v2067
        %v2069 = vrot.slane %v2047, %v2068
        %v2071 = vunpack.c.l.s4 1966171168
        %v2072 = vunpack.c.0.s8 %v2071
        %v2073 = vlaneseq
        %v2074 = vshrl.u32 %v2073, 7
        %v2075 = vsub.s32 %v2072, %v2074
        %v2076 = vrot.slane %v2048, %v2075
        %v2077 = vcombine.low %v2055, %v2062
        %v2078 = vcombine.low %v2069, %v2076
        %v2080 = vunpack.c.l.s4 1966171168
        %v2081 = vunpack.c.0.s8 %v2080
        %v2082 = vlaneseq
        %v2083 = vshrl.u32 %v2082, 7
        %v2084 = vsub.s32 %v2081, %v2083
        %v2085 = vrot.slane %v2077, %v2084
        %v2087 = vunpack.c.l.s4 1966171168
        %v2088 = vunpack.c.0.s8 %v2087
        %v2089 = vlaneseq
        %v2090 = vshrl.u32 %v2089, 7
        %v2091 = vsub.s32 %v2088, %v2090
        %v2092 = vrot.slane %v2078, %v2091
        %v2093 = vcombine.low %v2085, %v2092
        %v2094 = vcombine.low %v886, %v890
        %v2095 = vcombine.low %v894, %v898
        %v2096 = vcombine.low %v902, %v906
        %v2097 = vcombine.low %v910, %v914
        %v2099 = vunpack.c.l.s4 1966171168
        %v2100 = vunpack.c.0.s8 %v2099
        %v2101 = vlaneseq
        %v2102 = vshrl.u32 %v2101, 7
        %v2103 = vsub.s32 %v2100, %v2102
        %v2104 = vrot.slane %v2094, %v2103
        %v2106 = vunpack.c.l.s4 1966171168
        %v2107 = vunpack.c.0.s8 %v2106
        %v2108 = vlaneseq
        %v2109 = vshrl.u32 %v2108, 7
        %v2110 = vsub.s32 %v2107, %v2109
        %v2111 = vrot.slane %v2095, %v2110
        %v2113 = vunpack.c.l.s4 1966171168
        %v2114 = vunpack.c.0.s8 %v2113
        %v2115 = vlaneseq
        %v2116 = vshrl.u32 %v2115, 7
        %v2117 = vsub.s32 %v2114, %v2116
        %v2118 = vrot.slane %v2096, %v2117
        %v2120 = vunpack.c.l.s4 1966171168
        %v2121 = vunpack.c.0.s8 %v2120
        %v2122 = vlaneseq
        %v2123 = vshrl.u32 %v2122, 7
        %v2124 = vsub.s32 %v2121, %v2123
        %v2125 = vrot.slane %v2097, %v2124
        %v2126 = vcombine.low %v2104, %v2111
        %v2127 = vcombine.low %v2118, %v2125
        %v2129 = vunpack.c.l.s4 1966171168
        %v2130 = vunpack.c.0.s8 %v2129
        %v2131 = vlaneseq
        %v2132 = vshrl.u32 %v2131, 7
        %v2133 = vsub.s32 %v2130, %v2132
        %v2134 = vrot.slane %v2126, %v2133
        %v2136 = vunpack.c.l.s4 1966171168
        %v2137 = vunpack.c.0.s8 %v2136
        %v2138 = vlaneseq
        %v2139 = vshrl.u32 %v2138, 7
        %v2140 = vsub.s32 %v2137, %v2139
        %v2141 = vrot.slane %v2127, %v2140
        %v2142 = vcombine.low %v2134, %v2141
        %v2143 = vcombine.low %v918, %v922
        %v2144 = vcombine.low %v926, %v930
        %v2145 = vcombine.low %v934, %v938
        %v2146 = vcombine.low %v942, %v946
        %v2148 = vunpack.c.l.s4 1966171168
        %v2149 = vunpack.c.0.s8 %v2148
        %v2150 = vlaneseq
        %v2151 = vshrl.u32 %v2150, 7
        %v2152 = vsub.s32 %v2149, %v2151
        %v2153 = vrot.slane %v2143, %v2152
        %v2155 = vunpack.c.l.s4 1966171168
        %v2156 = vunpack.c.0.s8 %v2155
        %v2157 = vlaneseq
        %v2158 = vshrl.u32 %v2157, 7
        %v2159 = vsub.s32 %v2156, %v2158
        %v2160 = vrot.slane %v2144, %v2159
        %v2162 = vunpack.c.l.s4 1966171168
        %v2163 = vunpack.c.0.s8 %v2162
        %v2164 = vlaneseq
        %v2165 = vshrl.u32 %v2164, 7
        %v2166 = vsub.s32 %v2163, %v2165
        %v2167 = vrot.slane %v2145, %v2166
        %v2169 = vunpack.c.l.s4 1966171168
        %v2170 = vunpack.c.0.s8 %v2169
        %v2171 = vlaneseq
        %v2172 = vshrl.u32 %v2171, 7
        %v2173 = vsub.s32 %v2170, %v2172
        %v2174 = vrot.slane %v2146, %v2173
        %v2175 = vcombine.low %v2153, %v2160
        %v2176 = vcombine.low %v2167, %v2174
        %v2178 = vunpack.c.l.s4 1966171168
        %v2179 = vunpack.c.0.s8 %v2178
        %v2180 = vlaneseq
        %v2181 = vshrl.u32 %v2180, 7
        %v2182 = vsub.s32 %v2179, %v2181
        %v2183 = vrot.slane %v2175, %v2182
        %v2185 = vunpack.c.l.s4 1966171168
        %v2186 = vunpack.c.0.s8 %v2185
        %v2187 = vlaneseq
        %v2188 = vshrl.u32 %v2187, 7
        %v2189 = vsub.s32 %v2186, %v2188
        %v2190 = vrot.slane %v2176, %v2189
        %v2191 = vcombine.low %v2183, %v2190
        %v2192 = vcombine.low %v950, %v954
        %v2193 = vcombine.low %v958, %v962
        %v2194 = vcombine.low %v966, %v970
        %v2195 = vcombine.low %v974, %v978
        %v2197 = vunpack.c.l.s4 1966171168
        %v2198 = vunpack.c.0.s8 %v2197
        %v2199 = vlaneseq
        %v2200 = vshrl.u32 %v2199, 7
        %v2201 = vsub.s32 %v2198, %v2200
        %v2202 = vrot.slane %v2192, %v2201
        %v2204 = vunpack.c.l.s4 1966171168
        %v2205 = vunpack.c.0.s8 %v2204
        %v2206 = vlaneseq
        %v2207 = vshrl.u32 %v2206, 7
        %v2208 = vsub.s32 %v2205, %v2207
        %v2209 = vrot.slane %v2193, %v2208
        %v2211 = vunpack.c.l.s4 1966171168
        %v2212 = vunpack.c.0.s8 %v2211
        %v2213 = vlaneseq
        %v2214 = vshrl.u32 %v2213, 7
        %v2215 = vsub.s32 %v2212, %v2214
        %v2216 = vrot.slane %v2194, %v2215
        %v2218 = vunpack.c.l.s4 1966171168
        %v2219 = vunpack.c.0.s8 %v2218
        %v2220 = vlaneseq
        %v2221 = vshrl.u32 %v2220, 7
        %v2222 = vsub.s32 %v2219, %v2221
        %v2223 = vrot.slane %v2195, %v2222
        %v2224 = vcombine.low %v2202, %v2209
        %v2225 = vcombine.low %v2216, %v2223
        %v2227 = vunpack.c.l.s4 1966171168
        %v2228 = vunpack.c.0.s8 %v2227
        %v2229 = vlaneseq
        %v2230 = vshrl.u32 %v2229, 7
        %v2231 = vsub.s32 %v2228, %v2230
        %v2232 = vrot.slane %v2224, %v2231
        %v2234 = vunpack.c.l.s4 1966171168
        %v2235 = vunpack.c.0.s8 %v2234
        %v2236 = vlaneseq
        %v2237 = vshrl.u32 %v2236, 7
        %v2238 = vsub.s32 %v2235, %v2237
        %v2239 = vrot.slane %v2225, %v2238
        %v2240 = vcombine.low %v2232, %v2239
        %v2241 = vcombine.low %v982, %v986
        %v2242 = vcombine.low %v990, %v994
        %v2243 = vcombine.low %v998, %v1002
        %v2244 = vcombine.low %v1006, %v1010
        %v2246 = vunpack.c.l.s4 1966171168
        %v2247 = vunpack.c.0.s8 %v2246
        %v2248 = vlaneseq
        %v2249 = vshrl.u32 %v2248, 7
        %v2250 = vsub.s32 %v2247, %v2249
        %v2251 = vrot.slane %v2241, %v2250
        %v2253 = vunpack.c.l.s4 1966171168
        %v2254 = vunpack.c.0.s8 %v2253
        %v2255 = vlaneseq
        %v2256 = vshrl.u32 %v2255, 7
        %v2257 = vsub.s32 %v2254, %v2256
        %v2258 = vrot.slane %v2242, %v2257
        %v2260 = vunpack.c.l.s4 1966171168
        %v2261 = vunpack.c.0.s8 %v2260
        %v2262 = vlaneseq
        %v2263 = vshrl.u32 %v2262, 7
        %v2264 = vsub.s32 %v2261, %v2263
        %v2265 = vrot.slane %v2243, %v2264
        %v2267 = vunpack.c.l.s4 1966171168
        %v2268 = vunpack.c.0.s8 %v2267
        %v2269 = vlaneseq
        %v2270 = vshrl.u32 %v2269, 7
        %v2271 = vsub.s32 %v2268, %v2270
        %v2272 = vrot.slane %v2244, %v2271
        %v2273 = vcombine.low %v2251, %v2258
        %v2274 = vcombine.low %v2265, %v2272
        %v2276 = vunpack.c.l.s4 1966171168
        %v2277 = vunpack.c.0.s8 %v2276
        %v2278 = vlaneseq
        %v2279 = vshrl.u32 %v2278, 7
        %v2280 = vsub.s32 %v2277, %v2279
        %v2281 = vrot.slane %v2273, %v2280
        %v2283 = vunpack.c.l.s4 1966171168
        %v2284 = vunpack.c.0.s8 %v2283
        %v2285 = vlaneseq
        %v2286 = vshrl.u32 %v2285, 7
        %v2287 = vsub.s32 %v2284, %v2286
        %v2288 = vrot.slane %v2274, %v2287
        %v2289 = vcombine.low %v2281, %v2288
        %v2290 = vcombine.low %v1014, %v1018
        %v2291 = vcombine.low %v1022, %v1026
        %v2292 = vcombine.low %v1030, %v1034
        %v2293 = vcombine.low %v1038, %v1042
        %v2295 = vunpack.c.l.s4 1966171168
        %v2296 = vunpack.c.0.s8 %v2295
        %v2297 = vlaneseq
        %v2298 = vshrl.u32 %v2297, 7
        %v2299 = vsub.s32 %v2296, %v2298
        %v2300 = vrot.slane %v2290, %v2299
        %v2302 = vunpack.c.l.s4 1966171168
        %v2303 = vunpack.c.0.s8 %v2302
        %v2304 = vlaneseq
        %v2305 = vshrl.u32 %v2304, 7
        %v2306 = vsub.s32 %v2303, %v2305
        %v2307 = vrot.slane %v2291, %v2306
        %v2309 = vunpack.c.l.s4 1966171168
        %v2310 = vunpack.c.0.s8 %v2309
        %v2311 = vlaneseq
        %v2312 = vshrl.u32 %v2311, 7
        %v2313 = vsub.s32 %v2310, %v2312
        %v2314 = vrot.slane %v2292, %v2313
        %v2316 = vunpack.c.l.s4 1966171168
        %v2317 = vunpack.c.0.s8 %v2316
        %v2318 = vlaneseq
        %v2319 = vshrl.u32 %v2318, 7
        %v2320 = vsub.s32 %v2317, %v2319
        %v2321 = vrot.slane %v2293, %v2320
        %v2322 = vcombine.low %v2300, %v2307
        %v2323 = vcombine.low %v2314, %v2321
        %v2325 = vunpack.c.l.s4 1966171168
        %v2326 = vunpack.c.0.s8 %v2325
        %v2327 = vlaneseq
        %v2328 = vshrl.u32 %v2327, 7
        %v2329 = vsub.s32 %v2326, %v2328
        %v2330 = vrot.slane %v2322, %v2329
        %v2332 = vunpack.c.l.s4 1966171168
        %v2333 = vunpack.c.0.s8 %v2332
        %v2334 = vlaneseq
        %v2335 = vshrl.u32 %v2334, 7
        %v2336 = vsub.s32 %v2333, %v2335
        %v2337 = vrot.slane %v2323, %v2336
        %v2338 = vcombine.low %v2330, %v2337
        %v2339 = vcombine.low %v1046, %v1050
        %v2340 = vcombine.low %v1054, %v1058
        %v2341 = vcombine.low %v1062, %v1066
        %v2342 = vcombine.low %v1070, %v1074
        %v2344 = vunpack.c.l.s4 1966171168
        %v2345 = vunpack.c.0.s8 %v2344
        %v2346 = vlaneseq
        %v2347 = vshrl.u32 %v2346, 7
        %v2348 = vsub.s32 %v2345, %v2347
        %v2349 = vrot.slane %v2339, %v2348
        %v2351 = vunpack.c.l.s4 1966171168
        %v2352 = vunpack.c.0.s8 %v2351
        %v2353 = vlaneseq
        %v2354 = vshrl.u32 %v2353, 7
        %v2355 = vsub.s32 %v2352, %v2354
        %v2356 = vrot.slane %v2340, %v2355
        %v2358 = vunpack.c.l.s4 1966171168
        %v2359 = vunpack.c.0.s8 %v2358
        %v2360 = vlaneseq
        %v2361 = vshrl.u32 %v2360, 7
        %v2362 = vsub.s32 %v2359, %v2361
        %v2363 = vrot.slane %v2341, %v2362
        %v2365 = vunpack.c.l.s4 1966171168
        %v2366 = vunpack.c.0.s8 %v2365
        %v2367 = vlaneseq
        %v2368 = vshrl.u32 %v2367, 7
        %v2369 = vsub.s32 %v2366, %v2368
        %v2370 = vrot.slane %v2342, %v2369
        %v2371 = vcombine.low %v2349, %v2356
        %v2372 = vcombine.low %v2363, %v2370
        %v2374 = vunpack.c.l.s4 1966171168
        %v2375 = vunpack.c.0.s8 %v2374
        %v2376 = vlaneseq
        %v2377 = vshrl.u32 %v2376, 7
        %v2378 = vsub.s32 %v2375, %v2377
        %v2379 = vrot.slane %v2371, %v2378
        %v2381 = vunpack.c.l.s4 1966171168
        %v2382 = vunpack.c.0.s8 %v2381
        %v2383 = vlaneseq
        %v2384 = vshrl.u32 %v2383, 7
        %v2385 = vsub.s32 %v2382, %v2384
        %v2386 = vrot.slane %v2372, %v2385
        %v2387 = vcombine.low %v2379, %v2386
        %v2388 = vcombine.low %v1078, %v1082
        %v2389 = vcombine.low %v1086, %v1090
        %v2390 = vcombine.low %v1094, %v1098
        %v2391 = vcombine.low %v1102, %v1106
        %v2393 = vunpack.c.l.s4 1966171168
        %v2394 = vunpack.c.0.s8 %v2393
        %v2395 = vlaneseq
        %v2396 = vshrl.u32 %v2395, 7
        %v2397 = vsub.s32 %v2394, %v2396
        %v2398 = vrot.slane %v2388, %v2397
        %v2400 = vunpack.c.l.s4 1966171168
        %v2401 = vunpack.c.0.s8 %v2400
        %v2402 = vlaneseq
        %v2403 = vshrl.u32 %v2402, 7
        %v2404 = vsub.s32 %v2401, %v2403
        %v2405 = vrot.slane %v2389, %v2404
        %v2407 = vunpack.c.l.s4 1966171168
        %v2408 = vunpack.c.0.s8 %v2407
        %v2409 = vlaneseq
        %v2410 = vshrl.u32 %v2409, 7
        %v2411 = vsub.s32 %v2408, %v2410
        %v2412 = vrot.slane %v2390, %v2411
        %v2414 = vunpack.c.l.s4 1966171168
        %v2415 = vunpack.c.0.s8 %v2414
        %v2416 = vlaneseq
        %v2417 = vshrl.u32 %v2416, 7
        %v2418 = vsub.s32 %v2415, %v2417
        %v2419 = vrot.slane %v2391, %v2418
        %v2420 = vcombine.low %v2398, %v2405
        %v2421 = vcombine.low %v2412, %v2419
        %v2423 = vunpack.c.l.s4 1966171168
        %v2424 = vunpack.c.0.s8 %v2423
        %v2425 = vlaneseq
        %v2426 = vshrl.u32 %v2425, 7
        %v2427 = vsub.s32 %v2424, %v2426
        %v2428 = vrot.slane %v2420, %v2427
        %v2430 = vunpack.c.l.s4 1966171168
        %v2431 = vunpack.c.0.s8 %v2430
        %v2432 = vlaneseq
        %v2433 = vshrl.u32 %v2432, 7
        %v2434 = vsub.s32 %v2431, %v2433
        %v2435 = vrot.slane %v2421, %v2434
        %v2436 = vcombine.low %v2428, %v2435
        %v2437 = vcombine.low %v1110, %v1114
        %v2438 = vcombine.low %v1118, %v1122
        %v2439 = vcombine.low %v1126, %v1130
        %v2440 = vcombine.low %v1134, %v1138
        %v2442 = vunpack.c.l.s4 1966171168
        %v2443 = vunpack.c.0.s8 %v2442
        %v2444 = vlaneseq
        %v2445 = vshrl.u32 %v2444, 7
        %v2446 = vsub.s32 %v2443, %v2445
        %v2447 = vrot.slane %v2437, %v2446
        %v2449 = vunpack.c.l.s4 1966171168
        %v2450 = vunpack.c.0.s8 %v2449
        %v2451 = vlaneseq
        %v2452 = vshrl.u32 %v2451, 7
        %v2453 = vsub.s32 %v2450, %v2452
        %v2454 = vrot.slane %v2438, %v2453
        %v2456 = vunpack.c.l.s4 1966171168
        %v2457 = vunpack.c.0.s8 %v2456
        %v2458 = vlaneseq
        %v2459 = vshrl.u32 %v2458, 7
        %v2460 = vsub.s32 %v2457, %v2459
        %v2461 = vrot.slane %v2439, %v2460
        %v2463 = vunpack.c.l.s4 1966171168
        %v2464 = vunpack.c.0.s8 %v2463
        %v2465 = vlaneseq
        %v2466 = vshrl.u32 %v2465, 7
        %v2467 = vsub.s32 %v2464, %v2466
        %v2468 = vrot.slane %v2440, %v2467
        %v2469 = vcombine.low %v2447, %v2454
        %v2470 = vcombine.low %v2461, %v2468
        %v2472 = vunpack.c.l.s4 1966171168
        %v2473 = vunpack.c.0.s8 %v2472
        %v2474 = vlaneseq
        %v2475 = vshrl.u32 %v2474, 7
        %v2476 = vsub.s32 %v2473, %v2475
        %v2477 = vrot.slane %v2469, %v2476
        %v2479 = vunpack.c.l.s4 1966171168
        %v2480 = vunpack.c.0.s8 %v2479
        %v2481 = vlaneseq
        %v2482 = vshrl.u32 %v2481, 7
        %v2483 = vsub.s32 %v2480, %v2482
        %v2484 = vrot.slane %v2470, %v2483
        %v2485 = vcombine.low %v2477, %v2484
        %v2486 = vcombine.low %v1142, %v1146
        %v2487 = vcombine.low %v1150, %v1154
        %v2488 = vcombine.low %v1158, %v1162
        %v2489 = vcombine.low %v1166, %v1170
        %v2491 = vunpack.c.l.s4 1966171168
        %v2492 = vunpack.c.0.s8 %v2491
        %v2493 = vlaneseq
        %v2494 = vshrl.u32 %v2493, 7
        %v2495 = vsub.s32 %v2492, %v2494
        %v2496 = vrot.slane %v2486, %v2495
        %v2498 = vunpack.c.l.s4 1966171168
        %v2499 = vunpack.c.0.s8 %v2498
        %v2500 = vlaneseq
        %v2501 = vshrl.u32 %v2500, 7
        %v2502 = vsub.s32 %v2499, %v2501
        %v2503 = vrot.slane %v2487, %v2502
        %v2505 = vunpack.c.l.s4 1966171168
        %v2506 = vunpack.c.0.s8 %v2505
        %v2507 = vlaneseq
        %v2508 = vshrl.u32 %v2507, 7
        %v2509 = vsub.s32 %v2506, %v2508
        %v2510 = vrot.slane %v2488, %v2509
        %v2512 = vunpack.c.l.s4 1966171168
        %v2513 = vunpack.c.0.s8 %v2512
        %v2514 = vlaneseq
        %v2515 = vshrl.u32 %v2514, 7
        %v2516 = vsub.s32 %v2513, %v2515
        %v2517 = vrot.slane %v2489, %v2516
        %v2518 = vcombine.low %v2496, %v2503
        %v2519 = vcombine.low %v2510, %v2517
        %v2521 = vunpack.c.l.s4 1966171168
        %v2522 = vunpack.c.0.s8 %v2521
        %v2523 = vlaneseq
        %v2524 = vshrl.u32 %v2523, 7
        %v2525 = vsub.s32 %v2522, %v2524
        %v2526 = vrot.slane %v2518, %v2525
        %v2528 = vunpack.c.l.s4 1966171168
        %v2529 = vunpack.c.0.s8 %v2528
        %v2530 = vlaneseq
        %v2531 = vshrl.u32 %v2530, 7
        %v2532 = vsub.s32 %v2529, %v2531
        %v2533 = vrot.slane %v2519, %v2532
        %v2534 = vcombine.low %v2526, %v2533
        %v2535 = vcombine.low %v1174, %v1178
        %v2536 = vcombine.low %v1182, %v1186
        %v2537 = vcombine.low %v1190, %v1194
        %v2538 = vcombine.low %v1198, %v1202
        %v2540 = vunpack.c.l.s4 1966171168
        %v2541 = vunpack.c.0.s8 %v2540
        %v2542 = vlaneseq
        %v2543 = vshrl.u32 %v2542, 7
        %v2544 = vsub.s32 %v2541, %v2543
        %v2545 = vrot.slane %v2535, %v2544
        %v2547 = vunpack.c.l.s4 1966171168
        %v2548 = vunpack.c.0.s8 %v2547
        %v2549 = vlaneseq
        %v2550 = vshrl.u32 %v2549, 7
        %v2551 = vsub.s32 %v2548, %v2550
        %v2552 = vrot.slane %v2536, %v2551
        %v2554 = vunpack.c.l.s4 1966171168
        %v2555 = vunpack.c.0.s8 %v2554
        %v2556 = vlaneseq
        %v2557 = vshrl.u32 %v2556, 7
        %v2558 = vsub.s32 %v2555, %v2557
        %v2559 = vrot.slane %v2537, %v2558
        %v2561 = vunpack.c.l.s4 1966171168
        %v2562 = vunpack.c.0.s8 %v2561
        %v2563 = vlaneseq
        %v2564 = vshrl.u32 %v2563, 7
        %v2565 = vsub.s32 %v2562, %v2564
        %v2566 = vrot.slane %v2538, %v2565
        %v2567 = vcombine.low %v2545, %v2552
        %v2568 = vcombine.low %v2559, %v2566
        %v2570 = vunpack.c.l.s4 1966171168
        %v2571 = vunpack.c.0.s8 %v2570
        %v2572 = vlaneseq
        %v2573 = vshrl.u32 %v2572, 7
        %v2574 = vsub.s32 %v2571, %v2573
        %v2575 = vrot.slane %v2567, %v2574
        %v2577 = vunpack.c.l.s4 1966171168
        %v2578 = vunpack.c.0.s8 %v2577
        %v2579 = vlaneseq
        %v2580 = vshrl.u32 %v2579, 7
        %v2581 = vsub.s32 %v2578, %v2580
        %v2582 = vrot.slane %v2568, %v2581
        %v2583 = vcombine.low %v2575, %v2582
        %v2584 = vcombine.low %v1206, %v1210
        %v2585 = vcombine.low %v1214, %v1218
        %v2586 = vcombine.low %v1222, %v1226
        %v2587 = vcombine.low %v1230, %v1234
        %v2589 = vunpack.c.l.s4 1966171168
        %v2590 = vunpack.c.0.s8 %v2589
        %v2591 = vlaneseq
        %v2592 = vshrl.u32 %v2591, 7
        %v2593 = vsub.s32 %v2590, %v2592
        %v2594 = vrot.slane %v2584, %v2593
        %v2596 = vunpack.c.l.s4 1966171168
        %v2597 = vunpack.c.0.s8 %v2596
        %v2598 = vlaneseq
        %v2599 = vshrl.u32 %v2598, 7
        %v2600 = vsub.s32 %v2597, %v2599
        %v2601 = vrot.slane %v2585, %v2600
        %v2603 = vunpack.c.l.s4 1966171168
        %v2604 = vunpack.c.0.s8 %v2603
        %v2605 = vlaneseq
        %v2606 = vshrl.u32 %v2605, 7
        %v2607 = vsub.s32 %v2604, %v2606
        %v2608 = vrot.slane %v2586, %v2607
        %v2610 = vunpack.c.l.s4 1966171168
        %v2611 = vunpack.c.0.s8 %v2610
        %v2612 = vlaneseq
        %v2613 = vshrl.u32 %v2612, 7
        %v2614 = vsub.s32 %v2611, %v2613
        %v2615 = vrot.slane %v2587, %v2614
        %v2616 = vcombine.low %v2594, %v2601
        %v2617 = vcombine.low %v2608, %v2615
        %v2619 = vunpack.c.l.s4 1966171168
        %v2620 = vunpack.c.0.s8 %v2619
        %v2621 = vlaneseq
        %v2622 = vshrl.u32 %v2621, 7
        %v2623 = vsub.s32 %v2620, %v2622
        %v2624 = vrot.slane %v2616, %v2623
        %v2626 = vunpack.c.l.s4 1966171168
        %v2627 = vunpack.c.0.s8 %v2626
        %v2628 = vlaneseq
        %v2629 = vshrl.u32 %v2628, 7
        %v2630 = vsub.s32 %v2627, %v2629
        %v2631 = vrot.slane %v2617, %v2630
        %v2632 = vcombine.low %v2624, %v2631
        %v2633 = vcombine.low %v1238, %v1242
        %v2634 = vcombine.low %v1246, %v1250
        %v2635 = vcombine.low %v1254, %v1258
        %v2636 = vcombine.low %v1262, %v1266
        %v2638 = vunpack.c.l.s4 1966171168
        %v2639 = vunpack.c.0.s8 %v2638
        %v2640 = vlaneseq
        %v2641 = vshrl.u32 %v2640, 7
        %v2642 = vsub.s32 %v2639, %v2641
        %v2643 = vrot.slane %v2633, %v2642
        %v2645 = vunpack.c.l.s4 1966171168
        %v2646 = vunpack.c.0.s8 %v2645
        %v2647 = vlaneseq
        %v2648 = vshrl.u32 %v2647, 7
        %v2649 = vsub.s32 %v2646, %v2648
        %v2650 = vrot.slane %v2634, %v2649
        %v2652 = vunpack.c.l.s4 1966171168
        %v2653 = vunpack.c.0.s8 %v2652
        %v2654 = vlaneseq
        %v2655 = vshrl.u32 %v2654, 7
        %v2656 = vsub.s32 %v2653, %v2655
        %v2657 = vrot.slane %v2635, %v2656
        %v2659 = vunpack.c.l.s4 1966171168
        %v2660 = vunpack.c.0.s8 %v2659
        %v2661 = vlaneseq
        %v2662 = vshrl.u32 %v2661, 7
        %v2663 = vsub.s32 %v2660, %v2662
        %v2664 = vrot.slane %v2636, %v2663
        %v2665 = vcombine.low %v2643, %v2650
        %v2666 = vcombine.low %v2657, %v2664
        %v2668 = vunpack.c.l.s4 1966171168
        %v2669 = vunpack.c.0.s8 %v2668
        %v2670 = vlaneseq
        %v2671 = vshrl.u32 %v2670, 7
        %v2672 = vsub.s32 %v2669, %v2671
        %v2673 = vrot.slane %v2665, %v2672
        %v2675 = vunpack.c.l.s4 1966171168
        %v2676 = vunpack.c.0.s8 %v2675
        %v2677 = vlaneseq
        %v2678 = vshrl.u32 %v2677, 7
        %v2679 = vsub.s32 %v2676, %v2678
        %v2680 = vrot.slane %v2666, %v2679
        %v2681 = vcombine.low %v2673, %v2680
        %v2682 = vcombine.low %v1270, %v1274
        %v2683 = vcombine.low %v1278, %v1282
        %v2684 = vcombine.low %v1286, %v1290
        %v2685 = vcombine.low %v1294, %v1298
        %v2687 = vunpack.c.l.s4 1966171168
        %v2688 = vunpack.c.0.s8 %v2687
        %v2689 = vlaneseq
        %v2690 = vshrl.u32 %v2689, 7
        %v2691 = vsub.s32 %v2688, %v2690
        %v2692 = vrot.slane %v2682, %v2691
        %v2694 = vunpack.c.l.s4 1966171168
        %v2695 = vunpack.c.0.s8 %v2694
        %v2696 = vlaneseq
        %v2697 = vshrl.u32 %v2696, 7
        %v2698 = vsub.s32 %v2695, %v2697
        %v2699 = vrot.slane %v2683, %v2698
        %v2701 = vunpack.c.l.s4 1966171168
        %v2702 = vunpack.c.0.s8 %v2701
        %v2703 = vlaneseq
        %v2704 = vshrl.u32 %v2703, 7
        %v2705 = vsub.s32 %v2702, %v2704
        %v2706 = vrot.slane %v2684, %v2705
        %v2708 = vunpack.c.l.s4 1966171168
        %v2709 = vunpack.c.0.s8 %v2708
        %v2710 = vlaneseq
        %v2711 = vshrl.u32 %v2710, 7
        %v2712 = vsub.s32 %v2709, %v2711
        %v2713 = vrot.slane %v2685, %v2712
        %v2714 = vcombine.low %v2692, %v2699
        %v2715 = vcombine.low %v2706, %v2713
        %v2717 = vunpack.c.l.s4 1966171168
        %v2718 = vunpack.c.0.s8 %v2717
        %v2719 = vlaneseq
        %v2720 = vshrl.u32 %v2719, 7
        %v2721 = vsub.s32 %v2718, %v2720
        %v2722 = vrot.slane %v2714, %v2721
        %v2724 = vunpack.c.l.s4 1966171168
        %v2725 = vunpack.c.0.s8 %v2724
        %v2726 = vlaneseq
        %v2727 = vshrl.u32 %v2726, 7
        %v2728 = vsub.s32 %v2725, %v2727
        %v2729 = vrot.slane %v2715, %v2728
        %v2730 = vcombine.low %v2722, %v2729
        %v2731 = vcombine.low %v1302, %v1306
        %v2732 = vcombine.low %v1310, %v1314
        %v2733 = vcombine.low %v1318, %v1322
        %v2734 = vcombine.low %v1326, %v1330
        %v2736 = vunpack.c.l.s4 1966171168
        %v2737 = vunpack.c.0.s8 %v2736
        %v2738 = vlaneseq
        %v2739 = vshrl.u32 %v2738, 7
        %v2740 = vsub.s32 %v2737, %v2739
        %v2741 = vrot.slane %v2731, %v2740
        %v2743 = vunpack.c.l.s4 1966171168
        %v2744 = vunpack.c.0.s8 %v2743
        %v2745 = vlaneseq
        %v2746 = vshrl.u32 %v2745, 7
        %v2747 = vsub.s32 %v2744, %v2746
        %v2748 = vrot.slane %v2732, %v2747
        %v2750 = vunpack.c.l.s4 1966171168
        %v2751 = vunpack.c.0.s8 %v2750
        %v2752 = vlaneseq
        %v2753 = vshrl.u32 %v2752, 7
        %v2754 = vsub.s32 %v2751, %v2753
        %v2755 = vrot.slane %v2733, %v2754
        %v2757 = vunpack.c.l.s4 1966171168
        %v2758 = vunpack.c.0.s8 %v2757
        %v2759 = vlaneseq
        %v2760 = vshrl.u32 %v2759, 7
        %v2761 = vsub.s32 %v2758, %v2760
        %v2762 = vrot.slane %v2734, %v2761
        %v2763 = vcombine.low %v2741, %v2748
        %v2764 = vcombine.low %v2755, %v2762
        %v2766 = vunpack.c.l.s4 1966171168
        %v2767 = vunpack.c.0.s8 %v2766
        %v2768 = vlaneseq
        %v2769 = vshrl.u32 %v2768, 7
        %v2770 = vsub.s32 %v2767, %v2769
        %v2771 = vrot.slane %v2763, %v2770
        %v2773 = vunpack.c.l.s4 1966171168
        %v2774 = vunpack.c.0.s8 %v2773
        %v2775 = vlaneseq
        %v2776 = vshrl.u32 %v2775, 7
        %v2777 = vsub.s32 %v2774, %v2776
        %v2778 = vrot.slane %v2764, %v2777
        %v2779 = vcombine.low %v2771, %v2778
        %v2780 = vcombine.low %v1334, %v1338
        %v2781 = vcombine.low %v1342, %v1346
        %v2782 = vcombine.low %v1350, %v1354
        %v2783 = vcombine.low %v1358, %v1362
        %v2785 = vunpack.c.l.s4 1966171168
        %v2786 = vunpack.c.0.s8 %v2785
        %v2787 = vlaneseq
        %v2788 = vshrl.u32 %v2787, 7
        %v2789 = vsub.s32 %v2786, %v2788
        %v2790 = vrot.slane %v2780, %v2789
        %v2792 = vunpack.c.l.s4 1966171168
        %v2793 = vunpack.c.0.s8 %v2792
        %v2794 = vlaneseq
        %v2795 = vshrl.u32 %v2794, 7
        %v2796 = vsub.s32 %v2793, %v2795
        %v2797 = vrot.slane %v2781, %v2796
        %v2799 = vunpack.c.l.s4 1966171168
        %v2800 = vunpack.c.0.s8 %v2799
        %v2801 = vlaneseq
        %v2802 = vshrl.u32 %v2801, 7
        %v2803 = vsub.s32 %v2800, %v2802
        %v2804 = vrot.slane %v2782, %v2803
        %v2806 = vunpack.c.l.s4 1966171168
        %v2807 = vunpack.c.0.s8 %v2806
        %v2808 = vlaneseq
        %v2809 = vshrl.u32 %v2808, 7
        %v2810 = vsub.s32 %v2807, %v2809
        %v2811 = vrot.slane %v2783, %v2810
        %v2812 = vcombine.low %v2790, %v2797
        %v2813 = vcombine.low %v2804, %v2811
        %v2815 = vunpack.c.l.s4 1966171168
        %v2816 = vunpack.c.0.s8 %v2815
        %v2817 = vlaneseq
        %v2818 = vshrl.u32 %v2817, 7
        %v2819 = vsub.s32 %v2816, %v2818
        %v2820 = vrot.slane %v2812, %v2819
        %v2822 = vunpack.c.l.s4 1966171168
        %v2823 = vunpack.c.0.s8 %v2822
        %v2824 = vlaneseq
        %v2825 = vshrl.u32 %v2824, 7
        %v2826 = vsub.s32 %v2823, %v2825
        %v2827 = vrot.slane %v2813, %v2826
        %v2828 = vcombine.low %v2820, %v2827
        %v2829 = vcombine.low %v1366, %v1370
        %v2830 = vcombine.low %v1374, %v1378
        %v2831 = vcombine.low %v1382, %v1386
        %v2832 = vcombine.low %v1390, %v1394
        %v2834 = vunpack.c.l.s4 1966171168
        %v2835 = vunpack.c.0.s8 %v2834
        %v2836 = vlaneseq
        %v2837 = vshrl.u32 %v2836, 7
        %v2838 = vsub.s32 %v2835, %v2837
        %v2839 = vrot.slane %v2829, %v2838
        %v2841 = vunpack.c.l.s4 1966171168
        %v2842 = vunpack.c.0.s8 %v2841
        %v2843 = vlaneseq
        %v2844 = vshrl.u32 %v2843, 7
        %v2845 = vsub.s32 %v2842, %v2844
        %v2846 = vrot.slane %v2830, %v2845
        %v2848 = vunpack.c.l.s4 1966171168
        %v2849 = vunpack.c.0.s8 %v2848
        %v2850 = vlaneseq
        %v2851 = vshrl.u32 %v2850, 7
        %v2852 = vsub.s32 %v2849, %v2851
        %v2853 = vrot.slane %v2831, %v2852
        %v2855 = vunpack.c.l.s4 1966171168
        %v2856 = vunpack.c.0.s8 %v2855
        %v2857 = vlaneseq
        %v2858 = vshrl.u32 %v2857, 7
        %v2859 = vsub.s32 %v2856, %v2858
        %v2860 = vrot.slane %v2832, %v2859
        %v2861 = vcombine.low %v2839, %v2846
        %v2862 = vcombine.low %v2853, %v2860
        %v2864 = vunpack.c.l.s4 1966171168
        %v2865 = vunpack.c.0.s8 %v2864
        %v2866 = vlaneseq
        %v2867 = vshrl.u32 %v2866, 7
        %v2868 = vsub.s32 %v2865, %v2867
        %v2869 = vrot.slane %v2861, %v2868
        %v2871 = vunpack.c.l.s4 1966171168
        %v2872 = vunpack.c.0.s8 %v2871
        %v2873 = vlaneseq
        %v2874 = vshrl.u32 %v2873, 7
        %v2875 = vsub.s32 %v2872, %v2874
        %v2876 = vrot.slane %v2862, %v2875
        %v2877 = vcombine.low %v2869, %v2876
        %v2878 = vcombine.low %v1398, %v1402
        %v2879 = vcombine.low %v1406, %v1410
        %v2880 = vcombine.low %v1414, %v1418
        %v2881 = vcombine.low %v1422, %v1426
        %v2883 = vunpack.c.l.s4 1966171168
        %v2884 = vunpack.c.0.s8 %v2883
        %v2885 = vlaneseq
        %v2886 = vshrl.u32 %v2885, 7
        %v2887 = vsub.s32 %v2884, %v2886
        %v2888 = vrot.slane %v2878, %v2887
        %v2890 = vunpack.c.l.s4 1966171168
        %v2891 = vunpack.c.0.s8 %v2890
        %v2892 = vlaneseq
        %v2893 = vshrl.u32 %v2892, 7
        %v2894 = vsub.s32 %v2891, %v2893
        %v2895 = vrot.slane %v2879, %v2894
        %v2897 = vunpack.c.l.s4 1966171168
        %v2898 = vunpack.c.0.s8 %v2897
        %v2899 = vlaneseq
        %v2900 = vshrl.u32 %v2899, 7
        %v2901 = vsub.s32 %v2898, %v2900
        %v2902 = vrot.slane %v2880, %v2901
        %v2904 = vunpack.c.l.s4 1966171168
        %v2905 = vunpack.c.0.s8 %v2904
        %v2906 = vlaneseq
        %v2907 = vshrl.u32 %v2906, 7
        %v2908 = vsub.s32 %v2905, %v2907
        %v2909 = vrot.slane %v2881, %v2908
        %v2910 = vcombine.low %v2888, %v2895
        %v2911 = vcombine.low %v2902, %v2909
        %v2913 = vunpack.c.l.s4 1966171168
        %v2914 = vunpack.c.0.s8 %v2913
        %v2915 = vlaneseq
        %v2916 = vshrl.u32 %v2915, 7
        %v2917 = vsub.s32 %v2914, %v2916
        %v2918 = vrot.slane %v2910, %v2917
        %v2920 = vunpack.c.l.s4 1966171168
        %v2921 = vunpack.c.0.s8 %v2920
        %v2922 = vlaneseq
        %v2923 = vshrl.u32 %v2922, 7
        %v2924 = vsub.s32 %v2921, %v2923
        %v2925 = vrot.slane %v2911, %v2924
        %v2926 = vcombine.low %v2918, %v2925
        %v2927 = vcombine.low %v1430, %v1434
        %v2928 = vcombine.low %v1438, %v1442
        %v2929 = vcombine.low %v1446, %v1450
        %v2930 = vcombine.low %v1454, %v1458
        %v2932 = vunpack.c.l.s4 1966171168
        %v2933 = vunpack.c.0.s8 %v2932
        %v2934 = vlaneseq
        %v2935 = vshrl.u32 %v2934, 7
        %v2936 = vsub.s32 %v2933, %v2935
        %v2937 = vrot.slane %v2927, %v2936
        %v2939 = vunpack.c.l.s4 1966171168
        %v2940 = vunpack.c.0.s8 %v2939
        %v2941 = vlaneseq
        %v2942 = vshrl.u32 %v2941, 7
        %v2943 = vsub.s32 %v2940, %v2942
        %v2944 = vrot.slane %v2928, %v2943
        %v2946 = vunpack.c.l.s4 1966171168
        %v2947 = vunpack.c.0.s8 %v2946
        %v2948 = vlaneseq
        %v2949 = vshrl.u32 %v2948, 7
        %v2950 = vsub.s32 %v2947, %v2949
        %v2951 = vrot.slane %v2929, %v2950
        %v2953 = vunpack.c.l.s4 1966171168
        %v2954 = vunpack.c.0.s8 %v2953
        %v2955 = vlaneseq
        %v2956 = vshrl.u32 %v2955, 7
        %v2957 = vsub.s32 %v2954, %v2956
        %v2958 = vrot.slane %v2930, %v2957
        %v2959 = vcombine.low %v2937, %v2944
        %v2960 = vcombine.low %v2951, %v2958
        %v2962 = vunpack.c.l.s4 1966171168
        %v2963 = vunpack.c.0.s8 %v2962
        %v2964 = vlaneseq
        %v2965 = vshrl.u32 %v2964, 7
        %v2966 = vsub.s32 %v2963, %v2965
        %v2967 = vrot.slane %v2959, %v2966
        %v2969 = vunpack.c.l.s4 1966171168
        %v2970 = vunpack.c.0.s8 %v2969
        %v2971 = vlaneseq
        %v2972 = vshrl.u32 %v2971, 7
        %v2973 = vsub.s32 %v2970, %v2972
        %v2974 = vrot.slane %v2960, %v2973
        %v2975 = vcombine.low %v2967, %v2974
        %v2976 = vcombine.low %v1462, %v1466
        %v2977 = vcombine.low %v1470, %v1474
        %v2978 = vcombine.low %v1478, %v1482
        %v2979 = vcombine.low %v1486, %v1490
        %v2981 = vunpack.c.l.s4 1966171168
        %v2982 = vunpack.c.0.s8 %v2981
        %v2983 = vlaneseq
        %v2984 = vshrl.u32 %v2983, 7
        %v2985 = vsub.s32 %v2982, %v2984
        %v2986 = vrot.slane %v2976, %v2985
        %v2988 = vunpack.c.l.s4 1966171168
        %v2989 = vunpack.c.0.s8 %v2988
        %v2990 = vlaneseq
        %v2991 = vshrl.u32 %v2990, 7
        %v2992 = vsub.s32 %v2989, %v2991
        %v2993 = vrot.slane %v2977, %v2992
        %v2995 = vunpack.c.l.s4 1966171168
        %v2996 = vunpack.c.0.s8 %v2995
        %v2997 = vlaneseq
        %v2998 = vshrl.u32 %v2997, 7
        %v2999 = vsub.s32 %v2996, %v2998
        %v3000 = vrot.slane %v2978, %v2999
        %v3002 = vunpack.c.l.s4 1966171168
        %v3003 = vunpack.c.0.s8 %v3002
        %v3004 = vlaneseq
        %v3005 = vshrl.u32 %v3004, 7
        %v3006 = vsub.s32 %v3003, %v3005
        %v3007 = vrot.slane %v2979, %v3006
        %v3008 = vcombine.low %v2986, %v2993
        %v3009 = vcombine.low %v3000, %v3007
        %v3011 = vunpack.c.l.s4 1966171168
        %v3012 = vunpack.c.0.s8 %v3011
        %v3013 = vlaneseq
        %v3014 = vshrl.u32 %v3013, 7
        %v3015 = vsub.s32 %v3012, %v3014
        %v3016 = vrot.slane %v3008, %v3015
        %v3018 = vunpack.c.l.s4 1966171168
        %v3019 = vunpack.c.0.s8 %v3018
        %v3020 = vlaneseq
        %v3021 = vshrl.u32 %v3020, 7
        %v3022 = vsub.s32 %v3019, %v3021
        %v3023 = vrot.slane %v3009, %v3022
        %v3024 = vcombine.low %v3016, %v3023
        %v3025 = vcombine.low %v1494, %v1498
        %v3026 = vcombine.low %v1502, %v1506
        %v3027 = vcombine.low %v1510, %v1514
        %v3028 = vcombine.low %v1518, %v1522
        %v3030 = vunpack.c.l.s4 1966171168
        %v3031 = vunpack.c.0.s8 %v3030
        %v3032 = vlaneseq
        %v3033 = vshrl.u32 %v3032, 7
        %v3034 = vsub.s32 %v3031, %v3033
        %v3035 = vrot.slane %v3025, %v3034
        %v3037 = vunpack.c.l.s4 1966171168
        %v3038 = vunpack.c.0.s8 %v3037
        %v3039 = vlaneseq
        %v3040 = vshrl.u32 %v3039, 7
        %v3041 = vsub.s32 %v3038, %v3040
        %v3042 = vrot.slane %v3026, %v3041
        %v3044 = vunpack.c.l.s4 1966171168
        %v3045 = vunpack.c.0.s8 %v3044
        %v3046 = vlaneseq
        %v3047 = vshrl.u32 %v3046, 7
        %v3048 = vsub.s32 %v3045, %v3047
        %v3049 = vrot.slane %v3027, %v3048
        %v3051 = vunpack.c.l.s4 1966171168
        %v3052 = vunpack.c.0.s8 %v3051
        %v3053 = vlaneseq
        %v3054 = vshrl.u32 %v3053, 7
        %v3055 = vsub.s32 %v3052, %v3054
        %v3056 = vrot.slane %v3028, %v3055
        %v3057 = vcombine.low %v3035, %v3042
        %v3058 = vcombine.low %v3049, %v3056
        %v3060 = vunpack.c.l.s4 1966171168
        %v3061 = vunpack.c.0.s8 %v3060
        %v3062 = vlaneseq
        %v3063 = vshrl.u32 %v3062, 7
        %v3064 = vsub.s32 %v3061, %v3063
        %v3065 = vrot.slane %v3057, %v3064
        %v3067 = vunpack.c.l.s4 1966171168
        %v3068 = vunpack.c.0.s8 %v3067
        %v3069 = vlaneseq
        %v3070 = vshrl.u32 %v3069, 7
        %v3071 = vsub.s32 %v3068, %v3070
        %v3072 = vrot.slane %v3058, %v3071
        %v3073 = vcombine.low %v3065, %v3072
        %v3074 = vcombine.low %v1526, %v1530
        %v3075 = vcombine.low %v1534, %v1538
        %v3076 = vcombine.low %v1542, %v1546
        %v3077 = vcombine.low %v1550, %v1554
        %v3079 = vunpack.c.l.s4 1966171168
        %v3080 = vunpack.c.0.s8 %v3079
        %v3081 = vlaneseq
        %v3082 = vshrl.u32 %v3081, 7
        %v3083 = vsub.s32 %v3080, %v3082
        %v3084 = vrot.slane %v3074, %v3083
        %v3086 = vunpack.c.l.s4 1966171168
        %v3087 = vunpack.c.0.s8 %v3086
        %v3088 = vlaneseq
        %v3089 = vshrl.u32 %v3088, 7
        %v3090 = vsub.s32 %v3087, %v3089
        %v3091 = vrot.slane %v3075, %v3090
        %v3093 = vunpack.c.l.s4 1966171168
        %v3094 = vunpack.c.0.s8 %v3093
        %v3095 = vlaneseq
        %v3096 = vshrl.u32 %v3095, 7
        %v3097 = vsub.s32 %v3094, %v3096
        %v3098 = vrot.slane %v3076, %v3097
        %v3100 = vunpack.c.l.s4 1966171168
        %v3101 = vunpack.c.0.s8 %v3100
        %v3102 = vlaneseq
        %v3103 = vshrl.u32 %v3102, 7
        %v3104 = vsub.s32 %v3101, %v3103
        %v3105 = vrot.slane %v3077, %v3104
        %v3106 = vcombine.low %v3084, %v3091
        %v3107 = vcombine.low %v3098, %v3105
        %v3109 = vunpack.c.l.s4 1966171168
        %v3110 = vunpack.c.0.s8 %v3109
        %v3111 = vlaneseq
        %v3112 = vshrl.u32 %v3111, 7
        %v3113 = vsub.s32 %v3110, %v3112
        %v3114 = vrot.slane %v3106, %v3113
        %v3116 = vunpack.c.l.s4 1966171168
        %v3117 = vunpack.c.0.s8 %v3116
        %v3118 = vlaneseq
        %v3119 = vshrl.u32 %v3118, 7
        %v3120 = vsub.s32 %v3117, %v3119
        %v3121 = vrot.slane %v3107, %v3120
        %v3122 = vcombine.low %v3114, %v3121
        %3123 = vset.pattern.permute.xlu0 0
        %3124 = vperm.xlu0 %3123, %v1603
        %v3125 = vpop.permute.xlu0 %3124
        %3126 = vset.pattern.permute.xlu0 0
        %3127 = vperm.xlu0 %3126, %v1652
        %v3128 = vpop.permute.xlu0 %3127
        %3129 = vset.pattern.permute.xlu0 0
        %3130 = vperm.xlu0 %3129, %v1701
        %v3131 = vpop.permute.xlu0 %3130
        %3132 = vset.pattern.permute.xlu0 0
        %3133 = vperm.xlu0 %3132, %v1750
        %v3134 = vpop.permute.xlu0 %3133
        %3135 = vset.pattern.permute.xlu0 0
        %3136 = vperm.xlu0 %3135, %v1799
        %v3137 = vpop.permute.xlu0 %3136
        %3138 = vset.pattern.permute.xlu0 0
        %3139 = vperm.xlu0 %3138, %v1848
        %v3140 = vpop.permute.xlu0 %3139
        %3141 = vset.pattern.permute.xlu0 0
        %3142 = vperm.xlu0 %3141, %v1897
        %v3143 = vpop.permute.xlu0 %3142
        %3144 = vset.pattern.permute.xlu0 0
        %3145 = vperm.xlu0 %3144, %v1946
        %v3146 = vpop.permute.xlu0 %3145
        %3147 = vset.pattern.permute.xlu0 0
        %3148 = vperm.xlu0 %3147, %v1995
        %v3149 = vpop.permute.xlu0 %3148
        %3150 = vset.pattern.permute.xlu0 0
        %3151 = vperm.xlu0 %3150, %v2044
        %v3152 = vpop.permute.xlu0 %3151
        %3153 = vset.pattern.permute.xlu0 0
        %3154 = vperm.xlu0 %3153, %v2093
        %v3155 = vpop.permute.xlu0 %3154
        %3156 = vset.pattern.permute.xlu0 0
        %3157 = vperm.xlu0 %3156, %v2142
        %v3158 = vpop.permute.xlu0 %3157
        %3159 = vset.pattern.permute.xlu0 0
        %3160 = vperm.xlu0 %3159, %v2191
        %v3161 = vpop.permute.xlu0 %3160
        %3162 = vset.pattern.permute.xlu0 0
        %3163 = vperm.xlu0 %3162, %v2240
        %v3164 = vpop.permute.xlu0 %3163
        %3165 = vset.pattern.permute.xlu0 0
        %3166 = vperm.xlu0 %3165, %v2289
        %v3167 = vpop.permute.xlu0 %3166
        %3168 = vset.pattern.permute.xlu0 0
        %3169 = vperm.xlu0 %3168, %v2338
        %v3170 = vpop.permute.xlu0 %3169
        %3171 = vset.pattern.permute.xlu0 0
        %3172 = vperm.xlu0 %3171, %v2387
        %v3173 = vpop.permute.xlu0 %3172
        %3174 = vset.pattern.permute.xlu0 0
        %3175 = vperm.xlu0 %3174, %v2436
        %v3176 = vpop.permute.xlu0 %3175
        %3177 = vset.pattern.permute.xlu0 0
        %3178 = vperm.xlu0 %3177, %v2485
        %v3179 = vpop.permute.xlu0 %3178
        %3180 = vset.pattern.permute.xlu0 0
        %3181 = vperm.xlu0 %3180, %v2534
        %v3182 = vpop.permute.xlu0 %3181
        %3183 = vset.pattern.permute.xlu0 0
        %3184 = vperm.xlu0 %3183, %v2583
        %v3185 = vpop.permute.xlu0 %3184
        %3186 = vset.pattern.permute.xlu0 0
        %3187 = vperm.xlu0 %3186, %v2632
        %v3188 = vpop.permute.xlu0 %3187
        %3189 = vset.pattern.permute.xlu0 0
        %3190 = vperm.xlu0 %3189, %v2681
        %v3191 = vpop.permute.xlu0 %3190
        %3192 = vset.pattern.permute.xlu0 0
        %3193 = vperm.xlu0 %3192, %v2730
        %v3194 = vpop.permute.xlu0 %3193
        %3195 = vset.pattern.permute.xlu0 0
        %3196 = vperm.xlu0 %3195, %v2779
        %v3197 = vpop.permute.xlu0 %3196
        %3198 = vset.pattern.permute.xlu0 0
        %3199 = vperm.xlu0 %3198, %v2828
        %v3200 = vpop.permute.xlu0 %3199
        %3201 = vset.pattern.permute.xlu0 0
        %3202 = vperm.xlu0 %3201, %v2877
        %v3203 = vpop.permute.xlu0 %3202
        %3204 = vset.pattern.permute.xlu0 0
        %3205 = vperm.xlu0 %3204, %v2926
        %v3206 = vpop.permute.xlu0 %3205
        %3207 = vset.pattern.permute.xlu0 0
        %3208 = vperm.xlu0 %3207, %v2975
        %v3209 = vpop.permute.xlu0 %3208
        %3210 = vset.pattern.permute.xlu0 0
        %3211 = vperm.xlu0 %3210, %v3024
        %v3212 = vpop.permute.xlu0 %3211
        %3213 = vset.pattern.permute.xlu0 0
        %3214 = vperm.xlu0 %3213, %v3073
        %v3215 = vpop.permute.xlu0 %3214
        %3216 = vset.pattern.permute.xlu0 0
        %3217 = vperm.xlu0 %3216, %v3122
        %v3218 = vpop.permute.xlu0 %3217
        %v3219 = vlaneseq
        %v3220 = vand.u32 %v3219, 127
        %v3221 = vlaneseq
        %v3222 = vshrl.u32 %v3221, 7
        %v3223 = vsub.s32 %v3220, %v3222
        %v3224 = vrot.slane %v3125, %v3223
        %v3225 = vadd.s32 %v3220, 4294967288
        %v3226 = vlaneseq
        %v3227 = vshrl.u32 %v3226, 7
        %v3228 = vsub.s32 %v3225, %v3227
        %v3229 = vrot.slane %v3128, %v3228
        %vm3230 = vcmask 130112
        %v3231 = vsel %vm3230, %v3229, %v3224
        %v3232 = vadd.s32 %v3220, 4294967280
        %v3233 = vlaneseq
        %v3234 = vshrl.u32 %v3233, 7
        %v3235 = vsub.s32 %v3232, %v3234
        %v3236 = vrot.slane %v3131, %v3235
        %vm3237 = vcmask 195712
        %v3238 = vsel %vm3237, %v3236, %v3231
        %v3239 = vadd.s32 %v3220, 4294967272
        %v3240 = vlaneseq
        %v3241 = vshrl.u32 %v3240, 7
        %v3242 = vsub.s32 %v3239, %v3241
        %v3243 = vrot.slane %v3134, %v3242
        %vm3244 = vcmask 261312
        %v3245 = vsel %vm3244, %v3243, %v3238
        %v3246 = vadd.s32 %v3220, 4294967264
        %v3247 = vlaneseq
        %v3248 = vshrl.u32 %v3247, 7
        %v3249 = vsub.s32 %v3246, %v3248
        %v3250 = vrot.slane %v3137, %v3249
        %vm3251 = vcmask 326912
        %v3252 = vsel %vm3251, %v3250, %v3245
        %v3253 = vadd.s32 %v3220, 4294967256
        %v3254 = vlaneseq
        %v3255 = vshrl.u32 %v3254, 7
        %v3256 = vsub.s32 %v3253, %v3255
        %v3257 = vrot.slane %v3140, %v3256
        %vm3258 = vcmask 392512
        %v3259 = vsel %vm3258, %v3257, %v3252
        %v3260 = vadd.s32 %v3220, 4294967248
        %v3261 = vlaneseq
        %v3262 = vshrl.u32 %v3261, 7
        %v3263 = vsub.s32 %v3260, %v3262
        %v3264 = vrot.slane %v3143, %v3263
        %vm3265 = vcmask 458112
        %v3266 = vsel %vm3265, %v3264, %v3259
        %v3267 = vadd.s32 %v3220, 4294967240
        %v3268 = vlaneseq
        %v3269 = vshrl.u32 %v3268, 7
        %v3270 = vsub.s32 %v3267, %v3269
        %v3271 = vrot.slane %v3146, %v3270
        %vm3272 = vcmask 523712
        %v3273 = vsel %vm3272, %v3271, %v3266
        %v3274 = vadd.s32 %v3220, 4294967232
        %v3275 = vlaneseq
        %v3276 = vshrl.u32 %v3275, 7
        %v3277 = vsub.s32 %v3274, %v3276
        %v3278 = vrot.slane %v3149, %v3277
        %vm3279 = vcmask 589312
        %v3280 = vsel %vm3279, %v3278, %v3273
        %v3281 = vadd.s32 %v3220, 4294967224
        %v3282 = vlaneseq
        %v3283 = vshrl.u32 %v3282, 7
        %v3284 = vsub.s32 %v3281, %v3283
        %v3285 = vrot.slane %v3152, %v3284
        %vm3286 = vcmask 654912
        %v3287 = vsel %vm3286, %v3285, %v3280
        %v3288 = vadd.s32 %v3220, 4294967216
        %v3289 = vlaneseq
        %v3290 = vshrl.u32 %v3289, 7
        %v3291 = vsub.s32 %v3288, %v3290
        %v3292 = vrot.slane %v3155, %v3291
        %vm3293 = vcmask 720512
        %v3294 = vsel %vm3293, %v3292, %v3287
        %v3295 = vadd.s32 %v3220, 4294967208
        %v3296 = vlaneseq
        %v3297 = vshrl.u32 %v3296, 7
        %v3298 = vsub.s32 %v3295, %v3297
        %v3299 = vrot.slane %v3158, %v3298
        %vm3300 = vcmask 786112
        %v3301 = vsel %vm3300, %v3299, %v3294
        %v3302 = vadd.s32 %v3220, 4294967200
        %v3303 = vlaneseq
        %v3304 = vshrl.u32 %v3303, 7
        %v3305 = vsub.s32 %v3302, %v3304
        %v3306 = vrot.slane %v3161, %v3305
        %vm3307 = vcmask 851712
        %v3308 = vsel %vm3307, %v3306, %v3301
        %v3309 = vadd.s32 %v3220, 4294967192
        %v3310 = vlaneseq
        %v3311 = vshrl.u32 %v3310, 7
        %v3312 = vsub.s32 %v3309, %v3311
        %v3313 = vrot.slane %v3164, %v3312
        %vm3314 = vcmask 917312
        %v3315 = vsel %vm3314, %v3313, %v3308
        %v3316 = vadd.s32 %v3220, 4294967184
        %v3317 = vlaneseq
        %v3318 = vshrl.u32 %v3317, 7
        %v3319 = vsub.s32 %v3316, %v3318
        %v3320 = vrot.slane %v3167, %v3319
        %vm3321 = vcmask 982912
        %v3322 = vsel %vm3321, %v3320, %v3315
        %v3323 = vadd.s32 %v3220, 4294967176
        %v3324 = vlaneseq
        %v3325 = vshrl.u32 %v3324, 7
        %v3326 = vsub.s32 %v3323, %v3325
        %v3327 = vrot.slane %v3170, %v3326
        %vm3328 = vcmask 1048512
        %v3329 = vsel %vm3328, %v3327, %v3322
        %v3330 = vlaneseq
        %v3331 = vshrl.u32 %v3330, 7
        %v3332 = vsub.s32 %v3220, %v3331
        %v3333 = vrot.slane %v3173, %v3332
        %v3334 = vlaneseq
        %v3335 = vshrl.u32 %v3334, 7
        %v3336 = vsub.s32 %v3225, %v3335
        %v3337 = vrot.slane %v3176, %v3336
        %v3338 = vsel %vm3230, %v3337, %v3333
        %v3339 = vlaneseq
        %v3340 = vshrl.u32 %v3339, 7
        %v3341 = vsub.s32 %v3232, %v3340
        %v3342 = vrot.slane %v3179, %v3341
        %v3343 = vsel %vm3237, %v3342, %v3338
        %v3344 = vlaneseq
        %v3345 = vshrl.u32 %v3344, 7
        %v3346 = vsub.s32 %v3239, %v3345
        %v3347 = vrot.slane %v3182, %v3346
        %v3348 = vsel %vm3244, %v3347, %v3343
        %v3349 = vlaneseq
        %v3350 = vshrl.u32 %v3349, 7
        %v3351 = vsub.s32 %v3246, %v3350
        %v3352 = vrot.slane %v3185, %v3351
        %v3353 = vsel %vm3251, %v3352, %v3348
        %v3354 = vlaneseq
        %v3355 = vshrl.u32 %v3354, 7
        %v3356 = vsub.s32 %v3253, %v3355
        %v3357 = vrot.slane %v3188, %v3356
        %v3358 = vsel %vm3258, %v3357, %v3353
        %v3359 = vlaneseq
        %v3360 = vshrl.u32 %v3359, 7
        %v3361 = vsub.s32 %v3260, %v3360
        %v3362 = vrot.slane %v3191, %v3361
        %v3363 = vsel %vm3265, %v3362, %v3358
        %v3364 = vlaneseq
        %v3365 = vshrl.u32 %v3364, 7
        %v3366 = vsub.s32 %v3267, %v3365
        %v3367 = vrot.slane %v3194, %v3366
        %v3368 = vsel %vm3272, %v3367, %v3363
        %v3369 = vlaneseq
        %v3370 = vshrl.u32 %v3369, 7
        %v3371 = vsub.s32 %v3274, %v3370
        %v3372 = vrot.slane %v3197, %v3371
        %v3373 = vsel %vm3279, %v3372, %v3368
        %v3374 = vlaneseq
        %v3375 = vshrl.u32 %v3374, 7
        %v3376 = vsub.s32 %v3281, %v3375
        %v3377 = vrot.slane %v3200, %v3376
        %v3378 = vsel %vm3286, %v3377, %v3373
        %v3379 = vlaneseq
        %v3380 = vshrl.u32 %v3379, 7
        %v3381 = vsub.s32 %v3288, %v3380
        %v3382 = vrot.slane %v3203, %v3381
        %v3383 = vsel %vm3293, %v3382, %v3378
        %v3384 = vlaneseq
        %v3385 = vshrl.u32 %v3384, 7
        %v3386 = vsub.s32 %v3295, %v3385
        %v3387 = vrot.slane %v3206, %v3386
        %v3388 = vsel %vm3300, %v3387, %v3383
        %v3389 = vlaneseq
        %v3390 = vshrl.u32 %v3389, 7
        %v3391 = vsub.s32 %v3302, %v3390
        %v3392 = vrot.slane %v3209, %v3391
        %v3393 = vsel %vm3307, %v3392, %v3388
        %v3394 = vlaneseq
        %v3395 = vshrl.u32 %v3394, 7
        %v3396 = vsub.s32 %v3309, %v3395
        %v3397 = vrot.slane %v3212, %v3396
        %v3398 = vsel %vm3314, %v3397, %v3393
        %v3399 = vlaneseq
        %v3400 = vshrl.u32 %v3399, 7
        %v3401 = vsub.s32 %v3316, %v3400
        %v3402 = vrot.slane %v3215, %v3401
        %v3403 = vsel %vm3321, %v3402, %v3398
        %v3404 = vlaneseq
        %v3405 = vshrl.u32 %v3404, 7
        %v3406 = vsub.s32 %v3323, %v3405
        %v3407 = vrot.slane %v3218, %v3406
        %v3408 = vsel %vm3328, %v3407, %v3403
        %v3409 = vcombine.low %v3329, %v3408
        %v3411 = vunpack.c.l.s4 1966171168
        %v3412 = vunpack.c.0.s8 %v3411
        %v3413 = vlaneseq
        %v3414 = vshrl.u32 %v3413, 7
        %v3415 = vsub.s32 %v3412, %v3414
        %v3416 = vrot.slane %v3409, %v3415
        %v3418 = vunpack.c.l.s4 1966171168
        %v3419 = vunpack.c.0.s8 %v3418
        %v3420 = vlaneseq
        %v3421 = vshrl.u32 %v3420, 7
        %v3422 = vsub.s32 %v3419, %v3421
        %v3423 = vrot.slane %v3416, %v3422
        %v3425 = vlaneseq
        %vm3426 = vcmp.ge.s32.totalorder %v3425, 0
        %vm3427 = vcmp.lt.s32.totalorder %v3425, 256
        %vm3428 = vmand %vm3426, %vm3427
        %3429 = vst.msk [vmem:[%s220] sm:$0x3] %vm3428, %v3423
        %s3430 = sand.u32 %s116, 1
        %s3431 = scalar_lea.sflag [#allocation5], %s3430
        %s3432 = sand.u32 %s116, 1
        %s3433 = smul.addr %s3432, 2
        %s3434 = scalar_lea.vmem [#allocation6], %s3433
        // Predicated region
        $region37: #{tpu_custom_call.1} parent=31 // pred_check
          %p3435 = pneg %p126
        $region38: #{tpu_custom_call.1} parent=31 // pred_check_branch
          %3437 = sbr.rel (%p3435) target = $region40
        $region39: #{tpu_custom_call.1} parent=31 // pred_region
          %s3438 = smul.u32 2, %s25
          %s3440 = ssub.s32 32, 32
          %3441 = vsyncadd %s3431, %s3440
          %s3442 = smul.addr %s3438, 16
          %s3443 = scalar_lea.hbm %s3, %s3442
          %s3445 = sshll.u32 %s3434, 4
          %s3446 = int_to_ptr.vmem [resolvable:$true] %s3445
          %3448 = dma.vmem_to_hbm [thread:$0]  %s3446, 32, %s3443, %s3431
        $region40: #{tpu_custom_call.1} parent=31 // pred_fallthru
          _
      $region32: #{tpu_custom_call.1} parent=5 // pred_fallthru
        _
      %p3449 = scmp.le.s32.totalorder 2, %s16
      // Predicated region
      $region41: #{tpu_custom_call.1} parent=5 // pred_check
        %p3450 = pneg %p3449
      $region42: #{tpu_custom_call.1} parent=5 // pred_check_branch
        %3452 = sbr.rel (%p3450) target = $region44
      $region43: #{tpu_custom_call.1} parent=5 // pred_region
        %s3453 = ssub.s32 %s16, 2
        // Predicated region
        $region45: #{tpu_custom_call.1} parent=43 // pred_check
          %p3454 = pneg %p132
        $region46: #{tpu_custom_call.1} parent=43 // pred_check_branch
          %3456 = sbr.rel (%p3454) target = $region48
        $region47: #{tpu_custom_call.1} parent=43 // pred_region
          %s3457 = sand.u32 %s117, 1
          %s3458 = scalar_lea.sflag [#allocation5], %s3457
          %s3459 = sand.u32 %s117, 1
          %s3460 = smul.addr %s3459, 2
          %s3461 = scalar_lea.vmem [#allocation6], %s3460
          %3462 = dma.done %s3458, 32
        $region48: #{tpu_custom_call.1} parent=43 // pred_fallthru
          _
      $region44: #{tpu_custom_call.1} parent=5 // pred_fallthru
        _
    $region6: #{tpu_custom_call.1} parent=1 // loop_footer
      %s20 = sadd.s32 1, %s16
    $region7: #{tpu_custom_call.1} parent=1 // loop_footer_branch
      %15 = sbr.rel target = $region3
    $region8: #{tpu_custom_call.1} parent=1 // loop_exit
      _
    %3463 = vsyncpa [#allocation4], 1
    %s3464 = scalar_lea.sflag [#allocation4], 1
    %3465 = vsyncpa %s3464, 1
    %3466 = vsyncpa [#allocation5], 1
    %s3467 = scalar_lea.sflag [#allocation5], 1
    %3468 = vsyncpa %s3467, 1

</llo_original>
